<compile_context>
chip_gen: v6e
topology: v6e:2x2x1
jax: 0.10.0
libtpu: 0.0.40
codegen_flags: <defaults>
</compile_context>

<pallas_src>
import functools

import jax
import jax.numpy as jnp
from jax.experimental import pallas as pl
from jax.experimental.pallas import tpu as pltpu


def _pick_tile(dim, candidates):
    for c in candidates:
        if dim % c == 0:
            return c
    return dim  # fall back to the full (untiled) dimension


# ----------------------- Tiled matmul + bias kernel (MXU) -----------------------

def _matmul_bias_kernel(x_ref, w_ref, b_ref, o_ref, acc_ref):
    k = pl.program_id(2)

    @pl.when(k == 0)
    def _():
        acc_ref[...] = jnp.zeros_like(acc_ref)

    acc_ref[...] += jnp.dot(x_ref[...], w_ref[...],
                            preferred_element_type=jnp.float32)

    @pl.when(k == pl.num_programs(2) - 1)
    def _():
        o_ref[...] = (acc_ref[...] + b_ref[...]).astype(o_ref.dtype)


def matmul_bias(x, w, b):
    """x: (M, K), w: (K, N), b: (1, N) -> (M, N) f32, tiled over M/N/K."""
    M, K = x.shape
    K2, N = w.shape
    assert K2 == K
    tm = _pick_tile(M, (256, 128, 64, 32, 16, 8))
    tn = _pick_tile(N, (512, 256, 128))
    tk = _pick_tile(K, (512, 256, 128))
    grid = (M // tm, N // tn, K // tk)
    return pl.pallas_call(
        _matmul_bias_kernel,
        out_shape=jax.ShapeDtypeStruct((M, N), jnp.float32),
        grid_spec=pltpu.PrefetchScalarGridSpec(
            num_scalar_prefetch=0,
            grid=grid,
            in_specs=[
                pl.BlockSpec((tm, tk), lambda i, j, k: (i, k)),
                pl.BlockSpec((tk, tn), lambda i, j, k: (k, j)),
                pl.BlockSpec((1, tn), lambda i, j, k: (0, j)),
            ],
            out_specs=pl.BlockSpec((tm, tn), lambda i, j, k: (i, j)),
            scratch_shapes=[pltpu.VMEM((tm, tn), jnp.float32)],
        ),
        compiler_params=pltpu.CompilerParams(
            dimension_semantics=("parallel", "parallel", "arbitrary")),
    )(x, w, b)


# ------------------------- LSTM recurrence kernel -------------------------
# Per grid step: a block of T_BLOCK timesteps for one batch chunk.
# gpre_ref : (Tc, Bc, 4H)  precomputed x@W_ih^T + bias
# whh_hbm  : (H, 4H)       loop-invariant, copied ONCE per batch chunk into
#                          single-buffered VMEM scratch (no double buffering)
# y_ref    : (Tc, Bc, H)   hidden outputs
# h_sc/c_sc: (Bc, H)       f32 state carried across the (sequential) time grid

def _lstm_recurrence_kernel(gpre_ref, whh_hbm_ref, y_ref,
                            h_sc, c_sc, whh_vmem, dma_sem):
    t = pl.program_id(1)

    @pl.when(t == 0)
    def _():
        cp = pltpu.make_async_copy(whh_hbm_ref, whh_vmem, dma_sem)
        cp.start()
        h_sc[...] = jnp.zeros_like(h_sc)
        c_sc[...] = jnp.zeros_like(c_sc)
        cp.wait()

    H = h_sc.shape[-1]
    w_hh = whh_vmem[...]                      # loaded once per grid step
    t_block = gpre_ref.shape[0]

    def step(tt, carry):
        h, c = carry
        g = gpre_ref[tt] + jnp.dot(h, w_hh,
                                   preferred_element_type=jnp.float32)
        i_g = jax.nn.sigmoid(g[:, 0 * H:1 * H])
        f_g = jax.nn.sigmoid(g[:, 1 * H:2 * H])
        g_g = jnp.tanh(g[:, 2 * H:3 * H])
        o_g = jax.nn.sigmoid(g[:, 3 * H:4 * H])
        c_new = f_g * c + i_g * g_g
        h_new = o_g * jnp.tanh(c_new)
        y_ref[tt] = h_new.astype(y_ref.dtype)
        return h_new, c_new

    h_fin, c_fin = jax.lax.fori_loop(
        0, t_block, step, (h_sc[...], c_sc[...]), unroll=True)
    h_sc[...] = h_fin
    c_sc[...] = c_fin


def lstm_recurrence(gates_pre_tbg, w_hh_t, *, t_block=None, batch_block=None):
    """gates_pre_tbg: (T, B, 4H) time-major precomputed input gates."""
    T, B, G = gates_pre_tbg.shape
    H = w_hh_t.shape[0]
    assert G == 4 * H
    tc = t_block if t_block is not None else _pick_tile(T, (32, 16, 8))
    bc = batch_block if batch_block is not None else B
    grid = (B // bc, T // tc)
    return pl.pallas_call(
        _lstm_recurrence_kernel,
        out_shape=jax.ShapeDtypeStruct((T, B, H), jnp.float32),
        grid_spec=pltpu.PrefetchScalarGridSpec(
            num_scalar_prefetch=0,
            grid=grid,
            in_specs=[
                pl.BlockSpec((tc, bc, 4 * H), lambda b, t: (t, b, 0)),
                pl.BlockSpec(memory_space=pl.ANY),   # W_hh^T: manual one-shot DMA
            ],
            out_specs=pl.BlockSpec((tc, bc, H), lambda b, t: (t, b, 0)),
            scratch_shapes=[
                pltpu.VMEM((bc, H), jnp.float32),        # h state
                pltpu.VMEM((bc, H), jnp.float32),        # c state
                pltpu.VMEM((H, 4 * H), jnp.float32),     # single-buffered W_hh^T
                pltpu.SemaphoreType.DMA,
            ],
        ),
        compiler_params=pltpu.CompilerParams(
            dimension_semantics=("parallel", "arbitrary")),
    )(gates_pre_tbg, w_hh_t)


# ----------------------------- Full model -----------------------------

def init_params(key, vocab_size, input_dim, hidden_dim, num_layers):
    keys = jax.random.split(key, 3 + 4 * num_layers)
    params = {}
    params["embedding"] = jax.random.normal(
        keys[0], (vocab_size, input_dim), jnp.float32)
    bound = 1.0 / jnp.sqrt(hidden_dim)
    layers = []
    for l in range(num_layers):
        d_in = input_dim if l == 0 else hidden_dim
        k = keys[3 + 4 * l: 3 + 4 * (l + 1)]
        w_ih = jax.random.uniform(k[0], (4 * hidden_dim, d_in),
                                  jnp.float32, -bound, bound)
        w_hh = jax.random.uniform(k[1], (4 * hidden_dim, hidden_dim),
                                  jnp.float32, -bound, bound)
        b_ih = jax.random.uniform(k[2], (4 * hidden_dim,),
                                  jnp.float32, -bound, bound)
        b_hh = jax.random.uniform(k[3], (4 * hidden_dim,),
                                  jnp.float32, -bound, bound)
        layers.append({
            "w_ih_t": w_ih.T,                       # (D_in, 4H)
            "w_hh_t": w_hh.T,                       # (H, 4H)
            "bias": (b_ih + b_hh)[None, :],         # (1, 4H)
        })
    params["lstm"] = layers
    w_out = jax.random.uniform(keys[1], (vocab_size, hidden_dim),
                               jnp.float32, -bound, bound)
    b_out = jax.random.uniform(keys[2], (vocab_size,),
                               jnp.float32, -bound, bound)
    params["logits_w_t"] = w_out.T                  # (H, V)
    params["logits_b"] = b_out[None, :]             # (1, V)
    return params


@jax.jit
def lstm_model_forward(params, x_tokens):
    """x_tokens: int32 [B, T] -> logits f32 [B, T, V] (batch_first)."""
    B, T = x_tokens.shape
    emb = params["embedding"][x_tokens]             # (B, T, D) gather (glue)
    h = jnp.transpose(emb, (1, 0, 2))               # time-major (T, B, D)
    for layer in params["lstm"]:
        d_in = h.shape[-1]
        hid = layer["w_hh_t"].shape[0]
        # Hoisted input projection: one big parallel MXU matmul over all T*B rows.
        g_pre = matmul_bias(h.reshape(T * B, d_in), layer["w_ih_t"], layer["bias"])
        g_pre = g_pre.reshape(T, B, 4 * hid)
        # Sequential recurrence (only h @ W_hh^T per step).
        h = lstm_recurrence(g_pre, layer["w_hh_t"])
    hid = h.shape[-1]
    V = params["logits_w_t"].shape[1]
    logits = matmul_bias(h.reshape(T * B, hid),
                         params["logits_w_t"], params["logits_b"])
    return jnp.transpose(logits.reshape(T, B, V), (1, 0, 2))


# ----------------------------- Pure-JAX reference -----------------------------

def _reference_forward(params, x_tokens):
    emb = params["embedding"][x_tokens]
    h_seq = jnp.transpose(emb, (1, 0, 2))           # (T, B, D)
    for layer in params["lstm"]:
        Hd = layer["w_hh_t"].shape[0]
        B = h_seq.shape[1]

        def step(carry, x_t, layer=layer, Hd=Hd):
            h, c = carry
            g = x_t @ layer["w_ih_t"] + h @ layer["w_hh_t"] + layer["bias"]
            i = jax.nn.sigmoid(g[:, 0 * Hd:1 * Hd])
            f = jax.nn.sigmoid(g[:, 1 * Hd:2 * Hd])
            gg = jnp.tanh(g[:, 2 * Hd:3 * Hd])
            o = jax.nn.sigmoid(g[:, 3 * Hd:4 * Hd])
            c = f * c + i * gg
            h = o * jnp.tanh(c)
            return (h, c), h

        init = (jnp.zeros((B, Hd), jnp.float32), jnp.zeros((B, Hd), jnp.float32))
        _, h_seq = jax.lax.scan(step, init, h_seq)
    h_btH = jnp.transpose(h_seq, (1, 0, 2))
    return h_btH @ params["logits_w_t"] + params["logits_b"]


# ----------------------------- Main -----------------------------

if __name__ == "__main__":
    VOCAB = 50
    INPUT_DIM = 32
    HIDDEN_DIM = 32
    NUM_LAYERS = 2
    B, T = 2, 8

    key = jax.random.PRNGKey(0)
    k_params, k_tokens = jax.random.split(key)
    params = init_params(k_params, VOCAB, INPUT_DIM, HIDDEN_DIM, NUM_LAYERS)
    x = jax.random.randint(k_tokens, (B, T), 0, VOCAB, dtype=jnp.int32)

    out = lstm_model_forward(params, x)
    out = jax.block_until_ready(out)
    assert out.shape == (B, T, VOCAB), out.shape

    ref = _reference_forward(params, x)
    assert jnp.allclose(out, ref, rtol=1e-4, atol=1e-4), (
        float(jnp.max(jnp.abs(out - ref))))

    print("KERNEL_OK")
</pallas_src>

<mosaic_0001>
module attributes {stable_mosaic.version = 11 : i64} {
  func.func @_matmul_bias_kernel(%arg0: i32, %arg1: i32, %arg2: i32, %arg3: memref<16x32xf32, #tpu.memory_space<vmem>>, %arg4: memref<32x128xf32, #tpu.memory_space<vmem>>, %arg5: memref<1x128xf32, #tpu.memory_space<vmem>>, %arg6: memref<16x128xf32, #tpu.memory_space<vmem>>, %arg7: memref<16x128xf32, #tpu.memory_space<vmem>>) attributes {dimension_semantics = [#tpu.dimension_semantics<parallel>, #tpu.dimension_semantics<parallel>, #tpu.dimension_semantics<arbitrary>], iteration_bounds = array<i64: 1, 1, 1>, scalar_prefetch = 0 : i64, scratch_operands = 1 : i64, tpu.core_type = #tpu.core_type<tc>, window_params = [{transform_indices = @transform_0, window_bounds = array<i64: 16, 32>}, {transform_indices = @transform_1, window_bounds = array<i64: 32, 128>}, {transform_indices = @transform_2, window_bounds = array<i64: 1, 128>}, {transform_indices = @transform_3, window_bounds = array<i64: 16, 128>}]} {
    %c0_i32 = arith.constant 0 : i32
    %0 = arith.cmpi eq, %arg2, %c0_i32 : i32
    %1 = arith.extui %0 : i1 to i32
    %c0_i32_0 = arith.constant 0 : i32
    %2 = arith.cmpi ne, %1, %c0_i32_0 : i32
    scf.if %2 {
      %cst_10 = arith.constant 0.000000e+00 : f32
      %12 = vector.broadcast %cst_10 : f32 to vector<16x128xf32>
      %c0_11 = arith.constant 0 : index
      %c0_12 = arith.constant 0 : index
      %13 = vector.load %arg7[%c0_11, %c0_12] : memref<16x128xf32, #tpu.memory_space<vmem>>, vector<16x128xf32>
      tpu.vector_store %arg7[%c0_11, %c0_12], %12 {strides = array<i32>} : memref<16x128xf32, #tpu.memory_space<vmem>>, vector<16x128xf32>,
    } else {
    }
    %c0 = arith.constant 0 : index
    %c0_1 = arith.constant 0 : index
    %3 = vector.load %arg7[%c0, %c0_1] : memref<16x128xf32, #tpu.memory_space<vmem>>, vector<16x128xf32>
    %c0_2 = arith.constant 0 : index
    %c0_3 = arith.constant 0 : index
    %4 = vector.load %arg3[%c0_2, %c0_3] : memref<16x32xf32, #tpu.memory_space<vmem>>, vector<16x32xf32>
    %c0_4 = arith.constant 0 : index
    %c0_5 = arith.constant 0 : index
    %5 = vector.load %arg4[%c0_4, %c0_5] : memref<32x128xf32, #tpu.memory_space<vmem>>, vector<32x128xf32>
    %cst = arith.constant dense<0.000000e+00> : vector<16x128xf32>
    %6 = tpu.matmul %4, %5, %cst {dimension_numbers = #tpu.dot_dimension_numbers<[1], [0], [0], [1], [0, 0, 1, 1], [], []>} : vector<16x32xf32>, vector<32x128xf32>, vector<16x128xf32> -> vector<16x128xf32>
    %7 = arith.addf %3, %6 : vector<16x128xf32>
    %c0_6 = arith.constant 0 : index
    %c0_7 = arith.constant 0 : index
    %8 = vector.load %arg7[%c0_6, %c0_7] : memref<16x128xf32, #tpu.memory_space<vmem>>, vector<16x128xf32>
    tpu.vector_store %arg7[%c0_6, %c0_7], %7 {strides = array<i32>} : memref<16x128xf32, #tpu.memory_space<vmem>>, vector<16x128xf32>,
    %c0_i32_8 = arith.constant 0 : i32
    %9 = arith.cmpi eq, %arg2, %c0_i32_8 : i32
    %10 = arith.extui %9 : i1 to i32
    %c0_i32_9 = arith.constant 0 : i32
    %11 = arith.cmpi ne, %10, %c0_i32_9 : i32
    scf.if %11 {
      %c0_10 = arith.constant 0 : index
      %c0_11 = arith.constant 0 : index
      %12 = vector.load %arg7[%c0_10, %c0_11] : memref<16x128xf32, #tpu.memory_space<vmem>>, vector<16x128xf32>
      %c0_12 = arith.constant 0 : index
      %c0_13 = arith.constant 0 : index
      %13 = vector.load %arg5[%c0_12, %c0_13] : memref<1x128xf32, #tpu.memory_space<vmem>>, vector<1x128xf32>
      %14 = vector.broadcast %13 : vector<1x128xf32> to vector<16x128xf32>
      %15 = arith.addf %12, %14 : vector<16x128xf32>
      %c0_14 = arith.constant 0 : index
      %c0_15 = arith.constant 0 : index
      %16 = vector.load %arg6[%c0_14, %c0_15] : memref<16x128xf32, #tpu.memory_space<vmem>>, vector<16x128xf32>
      tpu.vector_store %arg6[%c0_14, %c0_15], %15 {strides = array<i32>} : memref<16x128xf32, #tpu.memory_space<vmem>>, vector<16x128xf32>,
    } else {
    }
    return
  }
  func.func @transform_0(%arg0: i32, %arg1: i32, %arg2: i32) -> (i32, i32) {
    %c0_i32 = arith.constant 0 : i32
    return %arg0, %arg2 : i32, i32
  }
  func.func @transform_1(%arg0: i32, %arg1: i32, %arg2: i32) -> (i32, i32) {
    %c0_i32 = arith.constant 0 : i32
    return %arg2, %arg1 : i32, i32
  }
  func.func @transform_2(%arg0: i32, %arg1: i32, %arg2: i32) -> (i32, i32) {
    %c0_i32 = arith.constant 0 : i32
    %c0_i32_0 = arith.constant 0 : i32
    return %c0_i32, %arg1 : i32, i32
  }
  func.func @transform_3(%arg0: i32, %arg1: i32, %arg2: i32) -> (i32, i32) {
    %c0_i32 = arith.constant 0 : i32
    return %arg0, %arg1 : i32, i32
  }
}

module attributes {stable_mosaic.version = 11 : i64} {
  func.func @_matmul_bias_kernel(%arg0: i32, %arg1: i32, %arg2: i32, %arg3: memref<16x32xf32, #tpu.memory_space<vmem>>, %arg4: memref<32x50xf32, #tpu.memory_space<vmem>>, %arg5: memref<1x50xf32, #tpu.memory_space<vmem>>, %arg6: memref<16x50xf32, #tpu.memory_space<vmem>>, %arg7: memref<16x50xf32, #tpu.memory_space<vmem>>) attributes {dimension_semantics = [#tpu.dimension_semantics<parallel>, #tpu.dimension_semantics<parallel>, #tpu.dimension_semantics<arbitrary>], iteration_bounds = array<i64: 1, 1, 1>, scalar_prefetch = 0 : i64, scratch_operands = 1 : i64, tpu.core_type = #tpu.core_type<tc>, window_params = [{transform_indices = @transform_0, window_bounds = array<i64: 16, 32>}, {transform_indices = @transform_1, window_bounds = array<i64: 32, 50>}, {transform_indices = @transform_2, window_bounds = array<i64: 1, 50>}, {transform_indices = @transform_3, window_bounds = array<i64: 16, 50>}]} {
    %c0_i32 = arith.constant 0 : i32
    %0 = arith.cmpi eq, %arg2, %c0_i32 : i32
    %1 = arith.extui %0 : i1 to i32
    %c0_i32_0 = arith.constant 0 : i32
    %2 = arith.cmpi ne, %1, %c0_i32_0 : i32
    scf.if %2 {
      %cst_10 = arith.constant 0.000000e+00 : f32
      %12 = vector.broadcast %cst_10 : f32 to vector<16x50xf32>
      %c0_11 = arith.constant 0 : index
      %c0_12 = arith.constant 0 : index
      %13 = vector.load %arg7[%c0_11, %c0_12] : memref<16x50xf32, #tpu.memory_space<vmem>>, vector<16x50xf32>
      tpu.vector_store %arg7[%c0_11, %c0_12], %12 {strides = array<i32>} : memref<16x50xf32, #tpu.memory_space<vmem>>, vector<16x50xf32>,
    } else {
    }
    %c0 = arith.constant 0 : index
    %c0_1 = arith.constant 0 : index
    %3 = vector.load %arg7[%c0, %c0_1] : memref<16x50xf32, #tpu.memory_space<vmem>>, vector<16x50xf32>
    %c0_2 = arith.constant 0 : index
    %c0_3 = arith.constant 0 : index
    %4 = vector.load %arg3[%c0_2, %c0_3] : memref<16x32xf32, #tpu.memory_space<vmem>>, vector<16x32xf32>
    %c0_4 = arith.constant 0 : index
    %c0_5 = arith.constant 0 : index
    %5 = vector.load %arg4[%c0_4, %c0_5] : memref<32x50xf32, #tpu.memory_space<vmem>>, vector<32x50xf32>
    %cst = arith.constant dense<0.000000e+00> : vector<16x50xf32>
    %6 = tpu.matmul %4, %5, %cst {dimension_numbers = #tpu.dot_dimension_numbers<[1], [0], [0], [1], [0, 0, 1, 1], [], []>} : vector<16x32xf32>, vector<32x50xf32>, vector<16x50xf32> -> vector<16x50xf32>
    %7 = arith.addf %3, %6 : vector<16x50xf32>
    %c0_6 = arith.constant 0 : index
    %c0_7 = arith.constant 0 : index
    %8 = vector.load %arg7[%c0_6, %c0_7] : memref<16x50xf32, #tpu.memory_space<vmem>>, vector<16x50xf32>
    tpu.vector_store %arg7[%c0_6, %c0_7], %7 {strides = array<i32>} : memref<16x50xf32, #tpu.memory_space<vmem>>, vector<16x50xf32>,
    %c0_i32_8 = arith.constant 0 : i32
    %9 = arith.cmpi eq, %arg2, %c0_i32_8 : i32
    %10 = arith.extui %9 : i1 to i32
    %c0_i32_9 = arith.constant 0 : i32
    %11 = arith.cmpi ne, %10, %c0_i32_9 : i32
    scf.if %11 {
      %c0_10 = arith.constant 0 : index
      %c0_11 = arith.constant 0 : index
      %12 = vector.load %arg7[%c0_10, %c0_11] : memref<16x50xf32, #tpu.memory_space<vmem>>, vector<16x50xf32>
      %c0_12 = arith.constant 0 : index
      %c0_13 = arith.constant 0 : index
      %13 = vector.load %arg5[%c0_12, %c0_13] : memref<1x50xf32, #tpu.memory_space<vmem>>, vector<1x50xf32>
      %14 = vector.broadcast %13 : vector<1x50xf32> to vector<16x50xf32>
      %15 = arith.addf %12, %14 : vector<16x50xf32>
      %c0_14 = arith.constant 0 : index
      %c0_15 = arith.constant 0 : index
      %16 = vector.load %arg6[%c0_14, %c0_15] : memref<16x50xf32, #tpu.memory_space<vmem>>, vector<16x50xf32>
      tpu.vector_store %arg6[%c0_14, %c0_15], %15 {strides = array<i32>} : memref<16x50xf32, #tpu.memory_space<vmem>>, vector<16x50xf32>,
    } else {
    }
    return
  }
  func.func @transform_0(%arg0: i32, %arg1: i32, %arg2: i32) -> (i32, i32) {
    %c0_i32 = arith.constant 0 : i32
    return %arg0, %arg2 : i32, i32
  }
  func.func @transform_1(%arg0: i32, %arg1: i32, %arg2: i32) -> (i32, i32) {
    %c0_i32 = arith.constant 0 : i32
    return %arg2, %arg1 : i32, i32
  }
  func.func @transform_2(%arg0: i32, %arg1: i32, %arg2: i32) -> (i32, i32) {
    %c0_i32 = arith.constant 0 : i32
    %c0_i32_0 = arith.constant 0 : i32
    return %c0_i32, %arg1 : i32, i32
  }
  func.func @transform_3(%arg0: i32, %arg1: i32, %arg2: i32) -> (i32, i32) {
    %c0_i32 = arith.constant 0 : i32
    return %arg0, %arg1 : i32, i32
  }
}

module attributes {stable_mosaic.version = 11 : i64} {
  func.func @_lstm_recurrence_kernel(%arg0: i32, %arg1: i32, %arg2: memref<8x2x128xf32, #tpu.memory_space<vmem>>, %arg3: memref<32x128xf32, #tpu.memory_space<any>>, %arg4: memref<8x2x32xf32, #tpu.memory_space<vmem>>, %arg5: memref<2x32xf32, #tpu.memory_space<vmem>>, %arg6: memref<2x32xf32, #tpu.memory_space<vmem>>, %arg7: memref<32x128xf32, #tpu.memory_space<vmem>>, %arg8: memref<!tpu.dma_semaphore, #tpu.memory_space<semaphore_mem>>) attributes {dimension_semantics = [#tpu.dimension_semantics<parallel>, #tpu.dimension_semantics<arbitrary>], iteration_bounds = array<i64: 1, 1>, scalar_prefetch = 0 : i64, scratch_operands = 4 : i64, tpu.core_type = #tpu.core_type<tc>, window_params = [{transform_indices = @transform_0, window_bounds = array<i64: 8, 2, 128>}, {}, {transform_indices = @transform_2, window_bounds = array<i64: 8, 2, 32>}]} {
    %c0_i32 = arith.constant 0 : i32
    %0 = arith.cmpi eq, %arg1, %c0_i32 : i32
    %1 = arith.extui %0 : i1 to i32
    %c0_i32_0 = arith.constant 0 : i32
    %2 = arith.cmpi ne, %1, %c0_i32_0 : i32
    scf.if %2 {
      tpu.enqueue_dma source(%arg3 : memref<32x128xf32, #tpu.memory_space<any>>) target(%arg7 : memref<32x128xf32, #tpu.memory_space<vmem>>) target_semaphore(%arg8 : memref<!tpu.dma_semaphore, #tpu.memory_space<semaphore_mem>>)
      %cst_74 = arith.constant 0.000000e+00 : f32
      %280 = vector.broadcast %cst_74 : f32 to vector<2x32xf32>
      %c0_75 = arith.constant 0 : index
      %c0_76 = arith.constant 0 : index
      %281 = vector.load %arg5[%c0_75, %c0_76] : memref<2x32xf32, #tpu.memory_space<vmem>>, vector<2x32xf32>
      tpu.vector_store %arg5[%c0_75, %c0_76], %280 {strides = array<i32>} : memref<2x32xf32, #tpu.memory_space<vmem>>, vector<2x32xf32>,
      %cst_77 = arith.constant 0.000000e+00 : f32
      %282 = vector.broadcast %cst_77 : f32 to vector<2x32xf32>
      %c0_78 = arith.constant 0 : index
      %c0_79 = arith.constant 0 : index
      %283 = vector.load %arg6[%c0_78, %c0_79] : memref<2x32xf32, #tpu.memory_space<vmem>>, vector<2x32xf32>
      tpu.vector_store %arg6[%c0_78, %c0_79], %282 {strides = array<i32>} : memref<2x32xf32, #tpu.memory_space<vmem>>, vector<2x32xf32>,
      tpu.wait_dma2 semaphore(%arg8 : memref<!tpu.dma_semaphore, #tpu.memory_space<semaphore_mem>>) src(%arg3 : memref<32x128xf32, #tpu.memory_space<any>>) dst(%arg7 : memref<32x128xf32, #tpu.memory_space<vmem>>)
    } else {
    }
    %c0 = arith.constant 0 : index
    %c0_1 = arith.constant 0 : index
    %3 = vector.load %arg7[%c0, %c0_1] : memref<32x128xf32, #tpu.memory_space<vmem>>, vector<32x128xf32>
    %c0_2 = arith.constant 0 : index
    %c0_3 = arith.constant 0 : index
    %4 = vector.load %arg5[%c0_2, %c0_3] : memref<2x32xf32, #tpu.memory_space<vmem>>, vector<2x32xf32>
    %c0_4 = arith.constant 0 : index
    %c0_5 = arith.constant 0 : index
    %5 = vector.load %arg6[%c0_4, %c0_5] : memref<2x32xf32, #tpu.memory_space<vmem>>, vector<2x32xf32>
    %c0_i32_6 = arith.constant 0 : i32
    %6 = arith.index_cast %c0_i32_6 : i32 to index
    %c0_7 = arith.constant 0 : index
    %c0_8 = arith.constant 0 : index
    %7 = vector.load %arg2[%6, %c0_7, %c0_8] : memref<8x2x128xf32, #tpu.memory_space<vmem>>, vector<1x2x128xf32>
    %8 = vector.shape_cast %7 : vector<1x2x128xf32> to vector<2x128xf32>
    %cst = arith.constant dense<0.000000e+00> : vector<2x128xf32>
    %9 = tpu.matmul %4, %3, %cst {dimension_numbers = #tpu.dot_dimension_numbers<[1], [0], [0], [1], [0, 0, 1, 1], [], []>} : vector<2x32xf32>, vector<32x128xf32>, vector<2x128xf32> -> vector<2x128xf32>
    %10 = arith.addf %8, %9 : vector<2x128xf32>
    %11 = vector.extract_strided_slice %10 {offsets = [0, 0], sizes = [2, 32], strides = [1, 1]} : vector<2x128xf32> to vector<2x32xf32>
    %12 = arith.negf %11 : vector<2x32xf32>
    %13 = math.exp %12 : vector<2x32xf32>
    %cst_9 = arith.constant 1.000000e+00 : f32
    %14 = vector.broadcast %cst_9 : f32 to vector<2x32xf32>
    %15 = arith.addf %14, %13 : vector<2x32xf32>
    %16 = arith.divf %14, %15 : vector<2x32xf32>
    %17 = vector.extract_strided_slice %10 {offsets = [0, 32], sizes = [2, 32], strides = [1, 1]} : vector<2x128xf32> to vector<2x32xf32>
    %18 = arith.negf %17 : vector<2x32xf32>
    %19 = math.exp %18 : vector<2x32xf32>
    %cst_10 = arith.constant 1.000000e+00 : f32
    %20 = vector.broadcast %cst_10 : f32 to vector<2x32xf32>
    %21 = arith.addf %20, %19 : vector<2x32xf32>
    %22 = arith.divf %20, %21 : vector<2x32xf32>
    %23 = vector.extract_strided_slice %10 {offsets = [0, 64], sizes = [2, 32], strides = [1, 1]} : vector<2x128xf32> to vector<2x32xf32>
    %24 = math.tanh %23 : vector<2x32xf32>
    %25 = vector.extract_strided_slice %10 {offsets = [0, 96], sizes = [2, 32], strides = [1, 1]} : vector<2x128xf32> to vector<2x32xf32>
    %26 = arith.negf %25 : vector<2x32xf32>
    %27 = math.exp %26 : vector<2x32xf32>
    %cst_11 = arith.constant 1.000000e+00 : f32
    %28 = vector.broadcast %cst_11 : f32 to vector<2x32xf32>
    %29 = arith.addf %28, %27 : vector<2x32xf32>
    %30 = arith.divf %28, %29 : vector<2x32xf32>
    %31 = arith.mulf %22, %5 : vector<2x32xf32>
    %32 = arith.mulf %16, %24 : vector<2x32xf32>
    %33 = arith.addf %31, %32 : vector<2x32xf32>
    %34 = math.tanh %33 : vector<2x32xf32>
    %35 = arith.mulf %30, %34 : vector<2x32xf32>
    %36 = arith.index_cast %c0_i32_6 : i32 to index
    %c0_12 = arith.constant 0 : index
    %c0_13 = arith.constant 0 : index
    %37 = vector.load %arg4[%36, %c0_12, %c0_13] : memref<8x2x32xf32, #tpu.memory_space<vmem>>, vector<1x2x32xf32>
    %38 = vector.shape_cast %37 : vector<1x2x32xf32> to vector<2x32xf32>
    %39 = vector.shape_cast %35 : vector<2x32xf32> to vector<1x2x32xf32>
    tpu.vector_store %arg4[%36, %c0_12, %c0_13], %39 {strides = array<i32>} : memref<8x2x32xf32, #tpu.memory_space<vmem>>, vector<1x2x32xf32>,
    %c1_i32 = arith.constant 1 : i32
    %40 = arith.index_cast %c1_i32 : i32 to index
    %c0_14 = arith.constant 0 : index
    %c0_15 = arith.constant 0 : index
    %41 = vector.load %arg2[%40, %c0_14, %c0_15] : memref<8x2x128xf32, #tpu.memory_space<vmem>>, vector<1x2x128xf32>
    %42 = vector.shape_cast %41 : vector<1x2x128xf32> to vector<2x128xf32>
    %cst_16 = arith.constant dense<0.000000e+00> : vector<2x128xf32>
    %43 = tpu.matmul %35, %3, %cst_16 {dimension_numbers = #tpu.dot_dimension_numbers<[1], [0], [0], [1], [0, 0, 1, 1], [], []>} : vector<2x32xf32>, vector<32x128xf32>, vector<2x128xf32> -> vector<2x128xf32>
    %44 = arith.addf %42, %43 : vector<2x128xf32>
    %45 = vector.extract_strided_slice %44 {offsets = [0, 0], sizes = [2, 32], strides = [1, 1]} : vector<2x128xf32> to vector<2x32xf32>
    %46 = arith.negf %45 : vector<2x32xf32>
    %47 = math.exp %46 : vector<2x32xf32>
    %cst_17 = arith.constant 1.000000e+00 : f32
    %48 = vector.broadcast %cst_17 : f32 to vector<2x32xf32>
    %49 = arith.addf %48, %47 : vector<2x32xf32>
    %50 = arith.divf %48, %49 : vector<2x32xf32>
    %51 = vector.extract_strided_slice %44 {offsets = [0, 32], sizes = [2, 32], strides = [1, 1]} : vector<2x128xf32> to vector<2x32xf32>
    %52 = arith.negf %51 : vector<2x32xf32>
    %53 = math.exp %52 : vector<2x32xf32>
    %cst_18 = arith.constant 1.000000e+00 : f32
    %54 = vector.broadcast %cst_18 : f32 to vector<2x32xf32>
    %55 = arith.addf %54, %53 : vector<2x32xf32>
    %56 = arith.divf %54, %55 : vector<2x32xf32>
    %57 = vector.extract_strided_slice %44 {offsets = [0, 64], sizes = [2, 32], strides = [1, 1]} : vector<2x128xf32> to vector<2x32xf32>
    %58 = math.tanh %57 : vector<2x32xf32>
    %59 = vector.extract_strided_slice %44 {offsets = [0, 96], sizes = [2, 32], strides = [1, 1]} : vector<2x128xf32> to vector<2x32xf32>
    %60 = arith.negf %59 : vector<2x32xf32>
    %61 = math.exp %60 : vector<2x32xf32>
    %cst_19 = arith.constant 1.000000e+00 : f32
    %62 = vector.broadcast %cst_19 : f32 to vector<2x32xf32>
    %63 = arith.addf %62, %61 : vector<2x32xf32>
    %64 = arith.divf %62, %63 : vector<2x32xf32>
    %65 = arith.mulf %56, %33 : vector<2x32xf32>
    %66 = arith.mulf %50, %58 : vector<2x32xf32>
    %67 = arith.addf %65, %66 : vector<2x32xf32>
    %68 = math.tanh %67 : vector<2x32xf32>
    %69 = arith.mulf %64, %68 : vector<2x32xf32>
    %70 = arith.index_cast %c1_i32 : i32 to index
    %c0_20 = arith.constant 0 : index
    %c0_21 = arith.constant 0 : index
    %71 = vector.load %arg4[%70, %c0_20, %c0_21] : memref<8x2x32xf32, #tpu.memory_space<vmem>>, vector<1x2x32xf32>
    %72 = vector.shape_cast %71 : vector<1x2x32xf32> to vector<2x32xf32>
    %73 = vector.shape_cast %69 : vector<2x32xf32> to vector<1x2x32xf32>
    tpu.vector_store %arg4[%70, %c0_20, %c0_21], %73 {strides = array<i32>} : memref<8x2x32xf32, #tpu.memory_space<vmem>>, vector<1x2x32xf32>,
    %c2_i32 = arith.constant 2 : i32
    %74 = arith.index_cast %c2_i32 : i32 to index
    %c0_22 = arith.constant 0 : index
    %c0_23 = arith.constant 0 : index
    %75 = vector.load %arg2[%74, %c0_22, %c0_23] : memref<8x2x128xf32, #tpu.memory_space<vmem>>, vector<1x2x128xf32>
    %76 = vector.shape_cast %75 : vector<1x2x128xf32> to vector<2x128xf32>
    %cst_24 = arith.constant dense<0.000000e+00> : vector<2x128xf32>
    %77 = tpu.matmul %69, %3, %cst_24 {dimension_numbers = #tpu.dot_dimension_numbers<[1], [0], [0], [1], [0, 0, 1, 1], [], []>} : vector<2x32xf32>, vector<32x128xf32>, vector<2x128xf32> -> vector<2x128xf32>
    %78 = arith.addf %76, %77 : vector<2x128xf32>
    %79 = vector.extract_strided_slice %78 {offsets = [0, 0], sizes = [2, 32], strides = [1, 1]} : vector<2x128xf32> to vector<2x32xf32>
    %80 = arith.negf %79 : vector<2x32xf32>
    %81 = math.exp %80 : vector<2x32xf32>
    %cst_25 = arith.constant 1.000000e+00 : f32
    %82 = vector.broadcast %cst_25 : f32 to vector<2x32xf32>
    %83 = arith.addf %82, %81 : vector<2x32xf32>
    %84 = arith.divf %82, %83 : vector<2x32xf32>
    %85 = vector.extract_strided_slice %78 {offsets = [0, 32], sizes = [2, 32], strides = [1, 1]} : vector<2x128xf32> to vector<2x32xf32>
    %86 = arith.negf %85 : vector<2x32xf32>
    %87 = math.exp %86 : vector<2x32xf32>
    %cst_26 = arith.constant 1.000000e+00 : f32
    %88 = vector.broadcast %cst_26 : f32 to vector<2x32xf32>
    %89 = arith.addf %88, %87 : vector<2x32xf32>
    %90 = arith.divf %88, %89 : vector<2x32xf32>
    %91 = vector.extract_strided_slice %78 {offsets = [0, 64], sizes = [2, 32], strides = [1, 1]} : vector<2x128xf32> to vector<2x32xf32>
    %92 = math.tanh %91 : vector<2x32xf32>
    %93 = vector.extract_strided_slice %78 {offsets = [0, 96], sizes = [2, 32], strides = [1, 1]} : vector<2x128xf32> to vector<2x32xf32>
    %94 = arith.negf %93 : vector<2x32xf32>
    %95 = math.exp %94 : vector<2x32xf32>
    %cst_27 = arith.constant 1.000000e+00 : f32
    %96 = vector.broadcast %cst_27 : f32 to vector<2x32xf32>
    %97 = arith.addf %96, %95 : vector<2x32xf32>
    %98 = arith.divf %96, %97 : vector<2x32xf32>
    %99 = arith.mulf %90, %67 : vector<2x32xf32>
    %100 = arith.mulf %84, %92 : vector<2x32xf32>
    %101 = arith.addf %99, %100 : vector<2x32xf32>
    %102 = math.tanh %101 : vector<2x32xf32>
    %103 = arith.mulf %98, %102 : vector<2x32xf32>
    %104 = arith.index_cast %c2_i32 : i32 to index
    %c0_28 = arith.constant 0 : index
    %c0_29 = arith.constant 0 : index
    %105 = vector.load %arg4[%104, %c0_28, %c0_29] : memref<8x2x32xf32, #tpu.memory_space<vmem>>, vector<1x2x32xf32>
    %106 = vector.shape_cast %105 : vector<1x2x32xf32> to vector<2x32xf32>
    %107 = vector.shape_cast %103 : vector<2x32xf32> to vector<1x2x32xf32>
    tpu.vector_store %arg4[%104, %c0_28, %c0_29], %107 {strides = array<i32>} : memref<8x2x32xf32, #tpu.memory_space<vmem>>, vector<1x2x32xf32>,
    %c3_i32 = arith.constant 3 : i32
    %108 = arith.index_cast %c3_i32 : i32 to index
    %c0_30 = arith.constant 0 : index
    %c0_31 = arith.constant 0 : index
    %109 = vector.load %arg2[%108, %c0_30, %c0_31] : memref<8x2x128xf32, #tpu.memory_space<vmem>>, vector<1x2x128xf32>
    %110 = vector.shape_cast %109 : vector<1x2x128xf32> to vector<2x128xf32>
    %cst_32 = arith.constant dense<0.000000e+00> : vector<2x128xf32>
    %111 = tpu.matmul %103, %3, %cst_32 {dimension_numbers = #tpu.dot_dimension_numbers<[1], [0], [0], [1], [0, 0, 1, 1], [], []>} : vector<2x32xf32>, vector<32x128xf32>, vector<2x128xf32> -> vector<2x128xf32>
    %112 = arith.addf %110, %111 : vector<2x128xf32>
    %113 = vector.extract_strided_slice %112 {offsets = [0, 0], sizes = [2, 32], strides = [1, 1]} : vector<2x128xf32> to vector<2x32xf32>
    %114 = arith.negf %113 : vector<2x32xf32>
    %115 = math.exp %114 : vector<2x32xf32>
    %cst_33 = arith.constant 1.000000e+00 : f32
    %116 = vector.broadcast %cst_33 : f32 to vector<2x32xf32>
    %117 = arith.addf %116, %115 : vector<2x32xf32>
    %118 = arith.divf %116, %117 : vector<2x32xf32>
    %119 = vector.extract_strided_slice %112 {offsets = [0, 32], sizes = [2, 32], strides = [1, 1]} : vector<2x128xf32> to vector<2x32xf32>
    %120 = arith.negf %119 : vector<2x32xf32>
    %121 = math.exp %120 : vector<2x32xf32>
    %cst_34 = arith.constant 1.000000e+00 : f32
    %122 = vector.broadcast %cst_34 : f32 to vector<2x32xf32>
    %123 = arith.addf %122, %121 : vector<2x32xf32>
    %124 = arith.divf %122, %123 : vector<2x32xf32>
    %125 = vector.extract_strided_slice %112 {offsets = [0, 64], sizes = [2, 32], strides = [1, 1]} : vector<2x128xf32> to vector<2x32xf32>
    %126 = math.tanh %125 : vector<2x32xf32>
    %127 = vector.extract_strided_slice %112 {offsets = [0, 96], sizes = [2, 32], strides = [1, 1]} : vector<2x128xf32> to vector<2x32xf32>
    %128 = arith.negf %127 : vector<2x32xf32>
    %129 = math.exp %128 : vector<2x32xf32>
    %cst_35 = arith.constant 1.000000e+00 : f32
    %130 = vector.broadcast %cst_35 : f32 to vector<2x32xf32>
    %131 = arith.addf %130, %129 : vector<2x32xf32>
    %132 = arith.divf %130, %131 : vector<2x32xf32>
    %133 = arith.mulf %124, %101 : vector<2x32xf32>
    %134 = arith.mulf %118, %126 : vector<2x32xf32>
    %135 = arith.addf %133, %134 : vector<2x32xf32>
    %136 = math.tanh %135 : vector<2x32xf32>
    %137 = arith.mulf %132, %136 : vector<2x32xf32>
    %138 = arith.index_cast %c3_i32 : i32 to index
    %c0_36 = arith.constant 0 : index
    %c0_37 = arith.constant 0 : index
    %139 = vector.load %arg4[%138, %c0_36, %c0_37] : memref<8x2x32xf32, #tpu.memory_space<vmem>>, vector<1x2x32xf32>
    %140 = vector.shape_cast %139 : vector<1x2x32xf32> to vector<2x32xf32>
    %141 = vector.shape_cast %137 : vector<2x32xf32> to vector<1x2x32xf32>
    tpu.vector_store %arg4[%138, %c0_36, %c0_37], %141 {strides = array<i32>} : memref<8x2x32xf32, #tpu.memory_space<vmem>>, vector<1x2x32xf32>,
    %c4_i32 = arith.constant 4 : i32
    %142 = arith.index_cast %c4_i32 : i32 to index
    %c0_38 = arith.constant 0 : index
    %c0_39 = arith.constant 0 : index
    %143 = vector.load %arg2[%142, %c0_38, %c0_39] : memref<8x2x128xf32, #tpu.memory_space<vmem>>, vector<1x2x128xf32>
    %144 = vector.shape_cast %143 : vector<1x2x128xf32> to vector<2x128xf32>
    %cst_40 = arith.constant dense<0.000000e+00> : vector<2x128xf32>
    %145 = tpu.matmul %137, %3, %cst_40 {dimension_numbers = #tpu.dot_dimension_numbers<[1], [0], [0], [1], [0, 0, 1, 1], [], []>} : vector<2x32xf32>, vector<32x128xf32>, vector<2x128xf32> -> vector<2x128xf32>
    %146 = arith.addf %144, %145 : vector<2x128xf32>
    %147 = vector.extract_strided_slice %146 {offsets = [0, 0], sizes = [2, 32], strides = [1, 1]} : vector<2x128xf32> to vector<2x32xf32>
    %148 = arith.negf %147 : vector<2x32xf32>
    %149 = math.exp %148 : vector<2x32xf32>
    %cst_41 = arith.constant 1.000000e+00 : f32
    %150 = vector.broadcast %cst_41 : f32 to vector<2x32xf32>
    %151 = arith.addf %150, %149 : vector<2x32xf32>
    %152 = arith.divf %150, %151 : vector<2x32xf32>
    %153 = vector.extract_strided_slice %146 {offsets = [0, 32], sizes = [2, 32], strides = [1, 1]} : vector<2x128xf32> to vector<2x32xf32>
    %154 = arith.negf %153 : vector<2x32xf32>
    %155 = math.exp %154 : vector<2x32xf32>
    %cst_42 = arith.constant 1.000000e+00 : f32
    %156 = vector.broadcast %cst_42 : f32 to vector<2x32xf32>
    %157 = arith.addf %156, %155 : vector<2x32xf32>
    %158 = arith.divf %156, %157 : vector<2x32xf32>
    %159 = vector.extract_strided_slice %146 {offsets = [0, 64], sizes = [2, 32], strides = [1, 1]} : vector<2x128xf32> to vector<2x32xf32>
    %160 = math.tanh %159 : vector<2x32xf32>
    %161 = vector.extract_strided_slice %146 {offsets = [0, 96], sizes = [2, 32], strides = [1, 1]} : vector<2x128xf32> to vector<2x32xf32>
    %162 = arith.negf %161 : vector<2x32xf32>
    %163 = math.exp %162 : vector<2x32xf32>
    %cst_43 = arith.constant 1.000000e+00 : f32
    %164 = vector.broadcast %cst_43 : f32 to vector<2x32xf32>
    %165 = arith.addf %164, %163 : vector<2x32xf32>
    %166 = arith.divf %164, %165 : vector<2x32xf32>
    %167 = arith.mulf %158, %135 : vector<2x32xf32>
    %168 = arith.mulf %152, %160 : vector<2x32xf32>
    %169 = arith.addf %167, %168 : vector<2x32xf32>
    %170 = math.tanh %169 : vector<2x32xf32>
    %171 = arith.mulf %166, %170 : vector<2x32xf32>
    %172 = arith.index_cast %c4_i32 : i32 to index
    %c0_44 = arith.constant 0 : index
    %c0_45 = arith.constant 0 : index
    %173 = vector.load %arg4[%172, %c0_44, %c0_45] : memref<8x2x32xf32, #tpu.memory_space<vmem>>, vector<1x2x32xf32>
    %174 = vector.shape_cast %173 : vector<1x2x32xf32> to vector<2x32xf32>
    %175 = vector.shape_cast %171 : vector<2x32xf32> to vector<1x2x32xf32>
    tpu.vector_store %arg4[%172, %c0_44, %c0_45], %175 {strides = array<i32>} : memref<8x2x32xf32, #tpu.memory_space<vmem>>, vector<1x2x32xf32>,
    %c5_i32 = arith.constant 5 : i32
    %176 = arith.index_cast %c5_i32 : i32 to index
    %c0_46 = arith.constant 0 : index
    %c0_47 = arith.constant 0 : index
    %177 = vector.load %arg2[%176, %c0_46, %c0_47] : memref<8x2x128xf32, #tpu.memory_space<vmem>>, vector<1x2x128xf32>
    %178 = vector.shape_cast %177 : vector<1x2x128xf32> to vector<2x128xf32>
    %cst_48 = arith.constant dense<0.000000e+00> : vector<2x128xf32>
    %179 = tpu.matmul %171, %3, %cst_48 {dimension_numbers = #tpu.dot_dimension_numbers<[1], [0], [0], [1], [0, 0, 1, 1], [], []>} : vector<2x32xf32>, vector<32x128xf32>, vector<2x128xf32> -> vector<2x128xf32>
    %180 = arith.addf %178, %179 : vector<2x128xf32>
    %181 = vector.extract_strided_slice %180 {offsets = [0, 0], sizes = [2, 32], strides = [1, 1]} : vector<2x128xf32> to vector<2x32xf32>
    %182 = arith.negf %181 : vector<2x32xf32>
    %183 = math.exp %182 : vector<2x32xf32>
    %cst_49 = arith.constant 1.000000e+00 : f32
    %184 = vector.broadcast %cst_49 : f32 to vector<2x32xf32>
    %185 = arith.addf %184, %183 : vector<2x32xf32>
    %186 = arith.divf %184, %185 : vector<2x32xf32>
    %187 = vector.extract_strided_slice %180 {offsets = [0, 32], sizes = [2, 32], strides = [1, 1]} : vector<2x128xf32> to vector<2x32xf32>
    %188 = arith.negf %187 : vector<2x32xf32>
    %189 = math.exp %188 : vector<2x32xf32>
    %cst_50 = arith.constant 1.000000e+00 : f32
    %190 = vector.broadcast %cst_50 : f32 to vector<2x32xf32>
    %191 = arith.addf %190, %189 : vector<2x32xf32>
    %192 = arith.divf %190, %191 : vector<2x32xf32>
    %193 = vector.extract_strided_slice %180 {offsets = [0, 64], sizes = [2, 32], strides = [1, 1]} : vector<2x128xf32> to vector<2x32xf32>
    %194 = math.tanh %193 : vector<2x32xf32>
    %195 = vector.extract_strided_slice %180 {offsets = [0, 96], sizes = [2, 32], strides = [1, 1]} : vector<2x128xf32> to vector<2x32xf32>
    %196 = arith.negf %195 : vector<2x32xf32>
    %197 = math.exp %196 : vector<2x32xf32>
    %cst_51 = arith.constant 1.000000e+00 : f32
    %198 = vector.broadcast %cst_51 : f32 to vector<2x32xf32>
    %199 = arith.addf %198, %197 : vector<2x32xf32>
    %200 = arith.divf %198, %199 : vector<2x32xf32>
    %201 = arith.mulf %192, %169 : vector<2x32xf32>
    %202 = arith.mulf %186, %194 : vector<2x32xf32>
    %203 = arith.addf %201, %202 : vector<2x32xf32>
    %204 = math.tanh %203 : vector<2x32xf32>
    %205 = arith.mulf %200, %204 : vector<2x32xf32>
    %206 = arith.index_cast %c5_i32 : i32 to index
    %c0_52 = arith.constant 0 : index
    %c0_53 = arith.constant 0 : index
    %207 = vector.load %arg4[%206, %c0_52, %c0_53] : memref<8x2x32xf32, #tpu.memory_space<vmem>>, vector<1x2x32xf32>
    %208 = vector.shape_cast %207 : vector<1x2x32xf32> to vector<2x32xf32>
    %209 = vector.shape_cast %205 : vector<2x32xf32> to vector<1x2x32xf32>
    tpu.vector_store %arg4[%206, %c0_52, %c0_53], %209 {strides = array<i32>} : memref<8x2x32xf32, #tpu.memory_space<vmem>>, vector<1x2x32xf32>,
    %c6_i32 = arith.constant 6 : i32
    %210 = arith.index_cast %c6_i32 : i32 to index
    %c0_54 = arith.constant 0 : index
    %c0_55 = arith.constant 0 : index
    %211 = vector.load %arg2[%210, %c0_54, %c0_55] : memref<8x2x128xf32, #tpu.memory_space<vmem>>, vector<1x2x128xf32>
    %212 = vector.shape_cast %211 : vector<1x2x128xf32> to vector<2x128xf32>
    %cst_56 = arith.constant dense<0.000000e+00> : vector<2x128xf32>
    %213 = tpu.matmul %205, %3, %cst_56 {dimension_numbers = #tpu.dot_dimension_numbers<[1], [0], [0], [1], [0, 0, 1, 1], [], []>} : vector<2x32xf32>, vector<32x128xf32>, vector<2x128xf32> -> vector<2x128xf32>
    %214 = arith.addf %212, %213 : vector<2x128xf32>
    %215 = vector.extract_strided_slice %214 {offsets = [0, 0], sizes = [2, 32], strides = [1, 1]} : vector<2x128xf32> to vector<2x32xf32>
    %216 = arith.negf %215 : vector<2x32xf32>
    %217 = math.exp %216 : vector<2x32xf32>
    %cst_57 = arith.constant 1.000000e+00 : f32
    %218 = vector.broadcast %cst_57 : f32 to vector<2x32xf32>
    %219 = arith.addf %218, %217 : vector<2x32xf32>
    %220 = arith.divf %218, %219 : vector<2x32xf32>
    %221 = vector.extract_strided_slice %214 {offsets = [0, 32], sizes = [2, 32], strides = [1, 1]} : vector<2x128xf32> to vector<2x32xf32>
    %222 = arith.negf %221 : vector<2x32xf32>
    %223 = math.exp %222 : vector<2x32xf32>
    %cst_58 = arith.constant 1.000000e+00 : f32
    %224 = vector.broadcast %cst_58 : f32 to vector<2x32xf32>
    %225 = arith.addf %224, %223 : vector<2x32xf32>
    %226 = arith.divf %224, %225 : vector<2x32xf32>
    %227 = vector.extract_strided_slice %214 {offsets = [0, 64], sizes = [2, 32], strides = [1, 1]} : vector<2x128xf32> to vector<2x32xf32>
    %228 = math.tanh %227 : vector<2x32xf32>
    %229 = vector.extract_strided_slice %214 {offsets = [0, 96], sizes = [2, 32], strides = [1, 1]} : vector<2x128xf32> to vector<2x32xf32>
    %230 = arith.negf %229 : vector<2x32xf32>
    %231 = math.exp %230 : vector<2x32xf32>
    %cst_59 = arith.constant 1.000000e+00 : f32
    %232 = vector.broadcast %cst_59 : f32 to vector<2x32xf32>
    %233 = arith.addf %232, %231 : vector<2x32xf32>
    %234 = arith.divf %232, %233 : vector<2x32xf32>
    %235 = arith.mulf %226, %203 : vector<2x32xf32>
    %236 = arith.mulf %220, %228 : vector<2x32xf32>
    %237 = arith.addf %235, %236 : vector<2x32xf32>
    %238 = math.tanh %237 : vector<2x32xf32>
    %239 = arith.mulf %234, %238 : vector<2x32xf32>
    %240 = arith.index_cast %c6_i32 : i32 to index
    %c0_60 = arith.constant 0 : index
    %c0_61 = arith.constant 0 : index
    %241 = vector.load %arg4[%240, %c0_60, %c0_61] : memref<8x2x32xf32, #tpu.memory_space<vmem>>, vector<1x2x32xf32>
    %242 = vector.shape_cast %241 : vector<1x2x32xf32> to vector<2x32xf32>
    %243 = vector.shape_cast %239 : vector<2x32xf32> to vector<1x2x32xf32>
    tpu.vector_store %arg4[%240, %c0_60, %c0_61], %243 {strides = array<i32>} : memref<8x2x32xf32, #tpu.memory_space<vmem>>, vector<1x2x32xf32>,
    %c7_i32 = arith.constant 7 : i32
    %244 = arith.index_cast %c7_i32 : i32 to index
    %c0_62 = arith.constant 0 : index
    %c0_63 = arith.constant 0 : index
    %245 = vector.load %arg2[%244, %c0_62, %c0_63] : memref<8x2x128xf32, #tpu.memory_space<vmem>>, vector<1x2x128xf32>
    %246 = vector.shape_cast %245 : vector<1x2x128xf32> to vector<2x128xf32>
    %cst_64 = arith.constant dense<0.000000e+00> : vector<2x128xf32>
    %247 = tpu.matmul %239, %3, %cst_64 {dimension_numbers = #tpu.dot_dimension_numbers<[1], [0], [0], [1], [0, 0, 1, 1], [], []>} : vector<2x32xf32>, vector<32x128xf32>, vector<2x128xf32> -> vector<2x128xf32>
    %248 = arith.addf %246, %247 : vector<2x128xf32>
    %249 = vector.extract_strided_slice %248 {offsets = [0, 0], sizes = [2, 32], strides = [1, 1]} : vector<2x128xf32> to vector<2x32xf32>
    %250 = arith.negf %249 : vector<2x32xf32>
    %251 = math.exp %250 : vector<2x32xf32>
    %cst_65 = arith.constant 1.000000e+00 : f32
    %252 = vector.broadcast %cst_65 : f32 to vector<2x32xf32>
    %253 = arith.addf %252, %251 : vector<2x32xf32>
    %254 = arith.divf %252, %253 : vector<2x32xf32>
    %255 = vector.extract_strided_slice %248 {offsets = [0, 32], sizes = [2, 32], strides = [1, 1]} : vector<2x128xf32> to vector<2x32xf32>
    %256 = arith.negf %255 : vector<2x32xf32>
    %257 = math.exp %256 : vector<2x32xf32>
    %cst_66 = arith.constant 1.000000e+00 : f32
    %258 = vector.broadcast %cst_66 : f32 to vector<2x32xf32>
    %259 = arith.addf %258, %257 : vector<2x32xf32>
    %260 = arith.divf %258, %259 : vector<2x32xf32>
    %261 = vector.extract_strided_slice %248 {offsets = [0, 64], sizes = [2, 32], strides = [1, 1]} : vector<2x128xf32> to vector<2x32xf32>
    %262 = math.tanh %261 : vector<2x32xf32>
    %263 = vector.extract_strided_slice %248 {offsets = [0, 96], sizes = [2, 32], strides = [1, 1]} : vector<2x128xf32> to vector<2x32xf32>
    %264 = arith.negf %263 : vector<2x32xf32>
    %265 = math.exp %264 : vector<2x32xf32>
    %cst_67 = arith.constant 1.000000e+00 : f32
    %266 = vector.broadcast %cst_67 : f32 to vector<2x32xf32>
    %267 = arith.addf %266, %265 : vector<2x32xf32>
    %268 = arith.divf %266, %267 : vector<2x32xf32>
    %269 = arith.mulf %260, %237 : vector<2x32xf32>
    %270 = arith.mulf %254, %262 : vector<2x32xf32>
    %271 = arith.addf %269, %270 : vector<2x32xf32>
    %272 = math.tanh %271 : vector<2x32xf32>
    %273 = arith.mulf %268, %272 : vector<2x32xf32>
    %274 = arith.index_cast %c7_i32 : i32 to index
    %c0_68 = arith.constant 0 : index
    %c0_69 = arith.constant 0 : index
    %275 = vector.load %arg4[%274, %c0_68, %c0_69] : memref<8x2x32xf32, #tpu.memory_space<vmem>>, vector<1x2x32xf32>
    %276 = vector.shape_cast %275 : vector<1x2x32xf32> to vector<2x32xf32>
    %277 = vector.shape_cast %273 : vector<2x32xf32> to vector<1x2x32xf32>
    tpu.vector_store %arg4[%274, %c0_68, %c0_69], %277 {strides = array<i32>} : memref<8x2x32xf32, #tpu.memory_space<vmem>>, vector<1x2x32xf32>,
    %c8_i32 = arith.constant 8 : i32
    %c0_70 = arith.constant 0 : index
    %c0_71 = arith.constant 0 : index
    %278 = vector.load %arg5[%c0_70, %c0_71] : memref<2x32xf32, #tpu.memory_space<vmem>>, vector<2x32xf32>
    tpu.vector_store %arg5[%c0_70, %c0_71], %273 {strides = array<i32>} : memref<2x32xf32, #tpu.memory_space<vmem>>, vector<2x32xf32>,
    %c0_72 = arith.constant 0 : index
    %c0_73 = arith.constant 0 : index
    %279 = vector.load %arg6[%c0_72, %c0_73] : memref<2x32xf32, #tpu.memory_space<vmem>>, vector<2x32xf32>
    tpu.vector_store %arg6[%c0_72, %c0_73], %271 {strides = array<i32>} : memref<2x32xf32, #tpu.memory_space<vmem>>, vector<2x32xf32>,
    return
  }
  func.func @transform_0(%arg0: i32, %arg1: i32) -> (i32, i32, i32) {
    %c0_i32 = arith.constant 0 : i32
    %c0_i32_0 = arith.constant 0 : i32
    return %arg1, %arg0, %c0_i32 : i32, i32, i32
  }
  func.func @transform_2(%arg0: i32, %arg1: i32) -> (i32, i32, i32) {
    %c0_i32 = arith.constant 0 : i32
    %c0_i32_0 = arith.constant 0 : i32
    return %arg1, %arg0, %c0_i32 : i32, i32, i32
  }
}

</mosaic_0001>

<llo_original>
// kernel: lstm_model_forward.9
$region0: #{lstm_model_forward.9}
  #allocation0 [shape = 'u32[]', space=smem, size = 0x4, offset = 0x4, fixed_abs, tag = 'smem constant byte address 0x4 - core index']
  #allocation1 [shape = 'u32[144,128]{1,0:T(1,128)}', space=vmem, size = 0x12000, scoped, tag = 'internal scratch']
  #allocation2 [shape = 'f32[16,50]{1,0:T(8,128)}', space=vmem, size = 0x2000, scoped, tag = 'scratch operand']
  %s0 = inlined_call_operand.vmem [shape: f32[16,32], index: 0, kind: input, shape index: {}]
  %s1 = inlined_call_operand.vmem [shape: f32[32,50], index: 1, kind: input, shape index: {}]
  %s2 = inlined_call_operand.vmem [shape: f32[1,50], index: 2, kind: input, shape index: {}]
  %s3 = inlined_call_operand.vmem [shape: f32[16,50], index: 3, kind: output, shape index: {}]
  %s4 = sld [smem:[#allocation0]]
  $region30: #{lstm_model_forward.9} parent=0
    _
  %s6 = ssub.s32 1, %s4
  %s7 = scalar_select 0, %s6, %s4
  // Predicated region
  $region2: #{lstm_model_forward.9} parent=0 // pred_check
    _
  $region3: #{lstm_model_forward.9} parent=0 // pred_check_branch
    %9 = sbr.rel (0) target = $region5
  $region4: #{lstm_model_forward.9} parent=0 // pred_region
    _
  $region5: #{lstm_model_forward.9} parent=0 // pred_fallthru
    _
  // Predicated region
  $region6: #{lstm_model_forward.9} parent=0 // pred_check
    _
  $region7: #{lstm_model_forward.9} parent=0 // pred_check_branch
    %11 = sbr.rel (0) target = $region9
  $region8: #{lstm_model_forward.9} parent=0 // pred_region
    _
  $region9: #{lstm_model_forward.9} parent=0 // pred_fallthru
    _
  // Predicated region
  $region10: #{lstm_model_forward.9} parent=0 // pred_check
    _
  $region11: #{lstm_model_forward.9} parent=0 // pred_check_branch
    %13 = sbr.rel (0) target = $region13
  $region12: #{lstm_model_forward.9} parent=0 // pred_region
    _
  $region13: #{lstm_model_forward.9} parent=0 // pred_fallthru
    _
  %p14 = scmp.eq.s32.totalorder 0, 0
  // Predicated region
  $region14: #{lstm_model_forward.9} parent=0 // pred_check
    %p15 = pneg %p14
  $region15: #{lstm_model_forward.9} parent=0 // pred_check_branch
    %17 = sbr.rel (%p15) target = $region17
  $region16: #{lstm_model_forward.9} parent=0 // pred_region
    %vm18 = vcmask 408576
    %19 = vst.msk [vmem:[#allocation2] sm:$0xff] %vm18, 0.0
    %20 = vst.msk [vmem:[#allocation2 + $0x8] sm:$0xff] %vm18, 0.0
  $region17: #{lstm_model_forward.9} parent=0 // pred_fallthru
    _
  %v21 = vld [vmem:[#allocation2] sm:$0xff]
  %v22 = vld [vmem:[#allocation2 + $0x8] sm:$0xff]
  %v23 = vld [vmem:[%s0] sm:$0xff]
  %v24 = vld [vmem:[%s0 + $0x8] sm:$0xff]
  %v25 = vld [vmem:[%s1] sm:$0xff]
  %v26 = vld [vmem:[%s1 + $0x8] sm:$0xff]
  %v27 = vld [vmem:[%s1 + $0x10] sm:$0xff]
  %v28 = vld [vmem:[%s1 + $0x18] sm:$0xff]
  %vm29 = vcmask 261120
  %v31 = vsel %vm29, %v23, 0
  %v34 = vsel %vm29, %v24, 0
  %36 = vmatprep.subr.mxu0 0.0
  %37 = vmatpush1.msra.mxu0 0.0
  %38 = vmatprep.subr.mxu0 0.0
  %39 = vmatpush1.msra.mxu0 0.0
  %40 = vmatprep.subr.mxu0 0.0
  %41 = vmatpush1.msra.mxu0 0.0
  %42 = vmatprep.subr.mxu0 0.0
  %43 = vmatpush1.msra.mxu0 0.0
  %44 = vmatprep.subr.mxu0 0.0
  %45 = vmatpush1.msra.mxu0 0.0
  %46 = vmatprep.subr.mxu0 0.0
  %47 = vmatpush1.msra.mxu0 0.0
  %48 = vmatprep.subr.mxu0 0.0
  %49 = vmatpush1.msra.mxu0 0.0
  %50 = vmatprep.subr.mxu0 0.0
  %51 = vmatpush1.msra.mxu0 0.0
  %52 = vmatprep.subr.mxu0 0.0
  %53 = vmatpush1.msra.mxu0 0.0
  %54 = vmatprep.subr.mxu0 0.0
  %55 = vmatpush1.msra.mxu0 0.0
  %56 = vmatprep.subr.mxu0 0.0
  %57 = vmatpush1.msra.mxu0 0.0
  %58 = vmatprep.subr.mxu0 0.0
  %59 = vmatpush1.msra.mxu0 0.0
  %60 = vmatprep.subr.mxu0 0.0
  %61 = vmatpush1.msra.mxu0 %v28
  %62 = vmatprep.subr.mxu0 0.0
  %63 = vmatpush1.msra.mxu0 %v27
  %64 = vmatprep.subr.mxu0 0.0
  %65 = vmatpush1.msra.mxu0 %v26
  %66 = vmatprep.subr.mxu0 0.0
  %67 = vmatpush1.msra.mxu0 %v25
  %68 = vmatprep.subr.mxu0 0.0
  %69 = vmatpush2.msra.mxu0 0.0
  %70 = vmatprep.subr.mxu0 0.0
  %71 = vmatpush2.msra.mxu0 0.0
  %72 = vmatprep.subr.mxu0 0.0
  %73 = vmatpush2.msra.mxu0 0.0
  %74 = vmatprep.subr.mxu0 0.0
  %75 = vmatpush2.msra.mxu0 0.0
  %76 = vmatprep.subr.mxu0 0.0
  %77 = vmatpush2.msra.mxu0 0.0
  %78 = vmatprep.subr.mxu0 0.0
  %79 = vmatpush2.msra.mxu0 0.0
  %80 = vmatprep.subr.mxu0 0.0
  %81 = vmatpush2.msra.mxu0 0.0
  %82 = vmatprep.subr.mxu0 0.0
  %83 = vmatpush2.msra.mxu0 0.0
  %84 = vmatprep.subr.mxu0 0.0
  %85 = vmatpush2.msra.mxu0 0.0
  %86 = vmatprep.subr.mxu0 0.0
  %87 = vmatpush2.msra.mxu0 0.0
  %88 = vmatprep.subr.mxu0 0.0
  %89 = vmatpush2.msra.mxu0 0.0
  %90 = vmatprep.subr.mxu0 0.0
  %91 = vmatpush2.msra.mxu0 0.0
  %92 = vmatprep.subr.mxu0 0.0
  %93 = vmatpush2.msra.mxu0 0.0
  %94 = vmatprep.subr.mxu0 0.0
  %95 = vmatpush2.msra.mxu0 0.0
  %96 = vmatprep.subr.mxu0 0.0
  %97 = vmatpush2.msra.mxu0 0.0
  %98 = vmatprep.subr.mxu0 0.0
  %99 = vmatpush2.msra.mxu0 0.0
  %100 = vmatprep.mubr.f32.mxu0 0.0
  %101 = vmatmul.mubr.f32.gmra.mxu0 %v31
  %v102 = vpop.f32.mrf.mxu0
  %v103 = vadd.f32 0.0, %v102
  %v104 = vpop.f32.mrf.mxu0
  %105 = vmatprep.mubr.f32.mxu0 0.0
  %106 = vmatmul.mubr.f32.gmra.mxu0 %v34
  %v107 = vpop.f32.mrf.mxu0
  %v108 = vadd.f32 0.0, %v107
  %v109 = vpop.f32.mrf.mxu0
  %110 = vdwg.mxu0
  %v111 = vadd.f32 %v21, %v103
  %v112 = vadd.f32 %v22, %v108
  %vm113 = vcmask 408576
  %114 = vst.msk [vmem:[#allocation2] sm:$0xff] %vm113, %v111
  %115 = vst.msk [vmem:[#allocation2 + $0x8] sm:$0xff] %vm113, %v112
  // Predicated region
  $region18: #{lstm_model_forward.9} parent=0 // pred_check
    %p116 = pneg %p14
  $region19: #{lstm_model_forward.9} parent=0 // pred_check_branch
    %118 = sbr.rel (%p116) target = $region21
  $region20: #{lstm_model_forward.9} parent=0 // pred_region
    %v119 = vld [vmem:[#allocation2] sm:$0xff]
    %v120 = vld [vmem:[#allocation2 + $0x8] sm:$0xff]
    %v121 = vld [vmem:[%s2] sm:$0x1]
    %v123 = vlaneseq
    %v124 = vshrl.u32 %v123, 7
    %v125 = vsub.s32 0, %v124
    %v126 = vrot.slane %v121, %v125
    %v128 = vadd.f32 %v119, %v126
    %v129 = vadd.f32 %v120, %v126
    %130 = vst.msk [vmem:[%s3] sm:$0xff] %vm113, %v128
    %131 = vst.msk [vmem:[%s3 + $0x8] sm:$0xff] %vm113, %v129
  $region21: #{lstm_model_forward.9} parent=0 // pred_fallthru
    _
  // Predicated region
  $region22: #{lstm_model_forward.9} parent=0 // pred_check
    _
  $region23: #{lstm_model_forward.9} parent=0 // pred_check_branch
    %133 = sbr.rel (0) target = $region25
  $region24: #{lstm_model_forward.9} parent=0 // pred_region
    _
  $region25: #{lstm_model_forward.9} parent=0 // pred_fallthru
    _
  // Predicated region
  $region26: #{lstm_model_forward.9} parent=0 // pred_check
    _
  $region27: #{lstm_model_forward.9} parent=0 // pred_check_branch
    %135 = sbr.rel (0) target = $region29
  $region28: #{lstm_model_forward.9} parent=0 // pred_region
    _
  $region29: #{lstm_model_forward.9} parent=0 // pred_fallthru
    _

// kernel: lstm_model_forward.5
$region0: #{lstm_model_forward.5}
  #allocation0 [shape = 'u32[]', space=smem, size = 0x4, offset = 0x4, fixed_abs, tag = 'smem constant byte address 0x4 - core index']
  #allocation1 [shape = 'u32[144,128]{1,0:T(1,128)}', space=vmem, size = 0x12000, scoped, tag = 'internal scratch']
  #allocation2 [shape = 'f32[16,128]{1,0:T(8,128)}', space=vmem, size = 0x2000, scoped, tag = 'scratch operand']
  %s0 = inlined_call_operand.vmem [shape: f32[16,32], index: 0, kind: input, shape index: {}]
  %s1 = inlined_call_operand.vmem [shape: f32[32,128], index: 1, kind: input, shape index: {}]
  %s2 = inlined_call_operand.vmem [shape: f32[1,128], index: 2, kind: input, shape index: {}]
  %s3 = inlined_call_operand.vmem [shape: f32[16,128], index: 3, kind: output, shape index: {}]
  %s4 = sld [smem:[#allocation0]]
  $region30: #{lstm_model_forward.5} parent=0
    _
  %s6 = ssub.s32 1, %s4
  %s7 = scalar_select 0, %s6, %s4
  // Predicated region
  $region2: #{lstm_model_forward.5} parent=0 // pred_check
    _
  $region3: #{lstm_model_forward.5} parent=0 // pred_check_branch
    %9 = sbr.rel (0) target = $region5
  $region4: #{lstm_model_forward.5} parent=0 // pred_region
    _
  $region5: #{lstm_model_forward.5} parent=0 // pred_fallthru
    _
  // Predicated region
  $region6: #{lstm_model_forward.5} parent=0 // pred_check
    _
  $region7: #{lstm_model_forward.5} parent=0 // pred_check_branch
    %11 = sbr.rel (0) target = $region9
  $region8: #{lstm_model_forward.5} parent=0 // pred_region
    _
  $region9: #{lstm_model_forward.5} parent=0 // pred_fallthru
    _
  // Predicated region
  $region10: #{lstm_model_forward.5} parent=0 // pred_check
    _
  $region11: #{lstm_model_forward.5} parent=0 // pred_check_branch
    %13 = sbr.rel (0) target = $region13
  $region12: #{lstm_model_forward.5} parent=0 // pred_region
    _
  $region13: #{lstm_model_forward.5} parent=0 // pred_fallthru
    _
  %p14 = scmp.eq.s32.totalorder 0, 0
  // Predicated region
  $region14: #{lstm_model_forward.5} parent=0 // pred_check
    %p15 = pneg %p14
  $region15: #{lstm_model_forward.5} parent=0 // pred_check_branch
    %17 = sbr.rel (%p15) target = $region17
  $region16: #{lstm_model_forward.5} parent=0 // pred_region
    %18 = vst [vmem:[#allocation2] sm:$0xff] 0.0
    %19 = vst [vmem:[#allocation2 + $0x8] sm:$0xff] 0.0
  $region17: #{lstm_model_forward.5} parent=0 // pred_fallthru
    _
  %v20 = vld [vmem:[#allocation2] sm:$0xff]
  %v21 = vld [vmem:[#allocation2 + $0x8] sm:$0xff]
  %v22 = vld [vmem:[%s0] sm:$0xff]
  %v23 = vld [vmem:[%s0 + $0x8] sm:$0xff]
  %v24 = vld [vmem:[%s1] sm:$0xff]
  %v25 = vld [vmem:[%s1 + $0x8] sm:$0xff]
  %v26 = vld [vmem:[%s1 + $0x10] sm:$0xff]
  %v27 = vld [vmem:[%s1 + $0x18] sm:$0xff]
  %vm28 = vcmask 261120
  %v30 = vsel %vm28, %v22, 0
  %v33 = vsel %vm28, %v23, 0
  %35 = vmatprep.subr.mxu0 0.0
  %36 = vmatpush1.msra.mxu0 0.0
  %37 = vmatprep.subr.mxu0 0.0
  %38 = vmatpush1.msra.mxu0 0.0
  %39 = vmatprep.subr.mxu0 0.0
  %40 = vmatpush1.msra.mxu0 0.0
  %41 = vmatprep.subr.mxu0 0.0
  %42 = vmatpush1.msra.mxu0 0.0
  %43 = vmatprep.subr.mxu0 0.0
  %44 = vmatpush1.msra.mxu0 0.0
  %45 = vmatprep.subr.mxu0 0.0
  %46 = vmatpush1.msra.mxu0 0.0
  %47 = vmatprep.subr.mxu0 0.0
  %48 = vmatpush1.msra.mxu0 0.0
  %49 = vmatprep.subr.mxu0 0.0
  %50 = vmatpush1.msra.mxu0 0.0
  %51 = vmatprep.subr.mxu0 0.0
  %52 = vmatpush1.msra.mxu0 0.0
  %53 = vmatprep.subr.mxu0 0.0
  %54 = vmatpush1.msra.mxu0 0.0
  %55 = vmatprep.subr.mxu0 0.0
  %56 = vmatpush1.msra.mxu0 0.0
  %57 = vmatprep.subr.mxu0 0.0
  %58 = vmatpush1.msra.mxu0 0.0
  %59 = vmatprep.subr.mxu0 0.0
  %60 = vmatpush1.msra.mxu0 %v27
  %61 = vmatprep.subr.mxu0 0.0
  %62 = vmatpush1.msra.mxu0 %v26
  %63 = vmatprep.subr.mxu0 0.0
  %64 = vmatpush1.msra.mxu0 %v25
  %65 = vmatprep.subr.mxu0 0.0
  %66 = vmatpush1.msra.mxu0 %v24
  %67 = vmatprep.subr.mxu0 0.0
  %68 = vmatpush2.msra.mxu0 0.0
  %69 = vmatprep.subr.mxu0 0.0
  %70 = vmatpush2.msra.mxu0 0.0
  %71 = vmatprep.subr.mxu0 0.0
  %72 = vmatpush2.msra.mxu0 0.0
  %73 = vmatprep.subr.mxu0 0.0
  %74 = vmatpush2.msra.mxu0 0.0
  %75 = vmatprep.subr.mxu0 0.0
  %76 = vmatpush2.msra.mxu0 0.0
  %77 = vmatprep.subr.mxu0 0.0
  %78 = vmatpush2.msra.mxu0 0.0
  %79 = vmatprep.subr.mxu0 0.0
  %80 = vmatpush2.msra.mxu0 0.0
  %81 = vmatprep.subr.mxu0 0.0
  %82 = vmatpush2.msra.mxu0 0.0
  %83 = vmatprep.subr.mxu0 0.0
  %84 = vmatpush2.msra.mxu0 0.0
  %85 = vmatprep.subr.mxu0 0.0
  %86 = vmatpush2.msra.mxu0 0.0
  %87 = vmatprep.subr.mxu0 0.0
  %88 = vmatpush2.msra.mxu0 0.0
  %89 = vmatprep.subr.mxu0 0.0
  %90 = vmatpush2.msra.mxu0 0.0
  %91 = vmatprep.subr.mxu0 0.0
  %92 = vmatpush2.msra.mxu0 0.0
  %93 = vmatprep.subr.mxu0 0.0
  %94 = vmatpush2.msra.mxu0 0.0
  %95 = vmatprep.subr.mxu0 0.0
  %96 = vmatpush2.msra.mxu0 0.0
  %97 = vmatprep.subr.mxu0 0.0
  %98 = vmatpush2.msra.mxu0 0.0
  %99 = vmatprep.mubr.f32.mxu0 0.0
  %100 = vmatmul.mubr.f32.gmra.mxu0 %v30
  %v101 = vpop.f32.mrf.mxu0
  %v102 = vadd.f32 0.0, %v101
  %v103 = vpop.f32.mrf.mxu0
  %104 = vmatprep.mubr.f32.mxu0 0.0
  %105 = vmatmul.mubr.f32.gmra.mxu0 %v33
  %v106 = vpop.f32.mrf.mxu0
  %v107 = vadd.f32 0.0, %v106
  %v108 = vpop.f32.mrf.mxu0
  %109 = vdwg.mxu0
  %v110 = vadd.f32 %v20, %v102
  %v111 = vadd.f32 %v21, %v107
  %112 = vst [vmem:[#allocation2] sm:$0xff] %v110
  %113 = vst [vmem:[#allocation2 + $0x8] sm:$0xff] %v111
  // Predicated region
  $region18: #{lstm_model_forward.5} parent=0 // pred_check
    %p114 = pneg %p14
  $region19: #{lstm_model_forward.5} parent=0 // pred_check_branch
    %116 = sbr.rel (%p114) target = $region21
  $region20: #{lstm_model_forward.5} parent=0 // pred_region
    %v117 = vld [vmem:[#allocation2] sm:$0xff]
    %v118 = vld [vmem:[#allocation2 + $0x8] sm:$0xff]
    %v119 = vld [vmem:[%s2] sm:$0x1]
    %v121 = vlaneseq
    %v122 = vshrl.u32 %v121, 7
    %v123 = vsub.s32 0, %v122
    %v124 = vrot.slane %v119, %v123
    %v126 = vadd.f32 %v117, %v124
    %v127 = vadd.f32 %v118, %v124
    %128 = vst [vmem:[%s3] sm:$0xff] %v126
    %129 = vst [vmem:[%s3 + $0x8] sm:$0xff] %v127
  $region21: #{lstm_model_forward.5} parent=0 // pred_fallthru
    _
  // Predicated region
  $region22: #{lstm_model_forward.5} parent=0 // pred_check
    _
  $region23: #{lstm_model_forward.5} parent=0 // pred_check_branch
    %131 = sbr.rel (0) target = $region25
  $region24: #{lstm_model_forward.5} parent=0 // pred_region
    _
  $region25: #{lstm_model_forward.5} parent=0 // pred_fallthru
    _
  // Predicated region
  $region26: #{lstm_model_forward.5} parent=0 // pred_check
    _
  $region27: #{lstm_model_forward.5} parent=0 // pred_check_branch
    %133 = sbr.rel (0) target = $region29
  $region28: #{lstm_model_forward.5} parent=0 // pred_region
    _
  $region29: #{lstm_model_forward.5} parent=0 // pred_fallthru
    _

// kernel: lstm_model_forward.6
$region0: #{lstm_model_forward.6}
  #allocation0 [shape = 'u32[]', space=smem, size = 0x4, offset = 0x4, fixed_abs, tag = 'smem constant byte address 0x4 - core index']
  #allocation1 [shape = 'u32[144,128]{1,0:T(1,128)}', space=vmem, size = 0x12000, scoped, tag = 'internal scratch']
  #allocation2 [shape = 'f32[2,32]{1,0:T(2,128)}', space=vmem, size = 0x400, scoped, tag = 'scratch operand']
  #allocation3 [shape = 'f32[2,32]{1,0:T(2,128)}', space=vmem, size = 0x400, scoped, tag = 'scratch operand']
  #allocation4 [shape = 'f32[32,128]{1,0:T(8,128)}', space=vmem, size = 0x4000, scoped, tag = 'scratch operand']
  #allocation5 [shape = 's32[1]{0}', space=sflag, size = 0x4, scoped, tag = 'scratch operand']
  #allocation6 [shape = 's32[]', space=sflag, size = 0x4, offset = 0, fixed_abs, tag = 'sflag constant byte address 0x0 - dummy sync flag']
  %s0 = inlined_call_operand.vmem [shape: f32[8,2,128], index: 0, kind: input, shape index: {}]
  %s1 = inlined_call_operand.vmem [shape: f32[32,128], index: 1, kind: input, shape index: {}]
  %s2 = inlined_call_operand.vmem [shape: f32[8,2,32], index: 2, kind: output, shape index: {}]
  %s3 = sld [smem:[#allocation0]]
  $region52: #{lstm_model_forward.6} parent=0
    _
  %s5 = ssub.s32 1, %s3
  %s6 = scalar_select 0, %s5, %s3
  // Predicated region
  $region2: #{lstm_model_forward.6} parent=0 // pred_check
    _
  $region3: #{lstm_model_forward.6} parent=0 // pred_check_branch
    %8 = sbr.rel (0) target = $region5
  $region4: #{lstm_model_forward.6} parent=0 // pred_region
    _
  $region5: #{lstm_model_forward.6} parent=0 // pred_fallthru
    _
  %p9 = scmp.eq.s32.totalorder 0, 0
  // Predicated region
  $region6: #{lstm_model_forward.6} parent=0 // pred_check
    %p10 = pneg %p9
  $region7: #{lstm_model_forward.6} parent=0 // pred_check_branch
    %12 = sbr.rel (%p10) target = $region9
  $region8: #{lstm_model_forward.6} parent=0 // pred_region
    %p14 = scmp.lt.u32.totalorder 32, 8
    %p15 = pneg %p14
    // Predicated region
    $region10: #{lstm_model_forward.6} parent=8 // pred_check
      _
    $region11: #{lstm_model_forward.6} parent=8 // pred_check_branch
      %17 = sbr.rel (%p14) target = $region13
    $region12: #{lstm_model_forward.6} parent=8 // pred_region
      %s33 = sand.u32 32, 7
      %p34 = scmp.eq.s32.totalorder %s33, 0
      // Predicated region
      $region25: #{lstm_model_forward.6} parent=12 // pred_check
        %p35 = pneg %p34
      $region26: #{lstm_model_forward.6} parent=12 // pred_check_branch
        %37 = sbr.rel (%p35) target = $region28
      $region27: #{lstm_model_forward.6} parent=12 // pred_region
        loop: start=0, step=1, limit=1
        $region29: #{lstm_model_forward.6} parent=27 // loop_pre_header
          _
        $region30: #{lstm_model_forward.6} parent=27 // loop_header
          %s39 = sphi 0, %s43
          %p40 = scmp.ge.s32.totalorder %s39, 1
          %s44 = sphi %s1, %s1
          %s45 = sphi [#allocation4], [#allocation4]
        $region31: #{lstm_model_forward.6} parent=27 // loop_header_branch
          %42 = sbr.rel (%p40) target = $region35
        $region32: #{lstm_model_forward.6} parent=27 // loop_body
          %v46 = vld [vmem:[%s44] sm:$0xff]
          %47 = vst [vmem:[%s45] sm:$0xff] %v46
          %v48 = vld [vmem:[%s44 + $0x8] sm:$0xff]
          %49 = vst [vmem:[%s45 + $0x8] sm:$0xff] %v48
          %v50 = vld [vmem:[%s44 + $0x10] sm:$0xff]
          %51 = vst [vmem:[%s45 + $0x10] sm:$0xff] %v50
          %v52 = vld [vmem:[%s44 + $0x18] sm:$0xff]
          %53 = vst [vmem:[%s45 + $0x18] sm:$0xff] %v52
        $region33: #{lstm_model_forward.6} parent=27 // loop_footer
          %s43 = sadd.s32 1, %s39
        $region34: #{lstm_model_forward.6} parent=27 // loop_footer_branch
          %38 = sbr.rel target = $region30
        $region35: #{lstm_model_forward.6} parent=27 // loop_exit
          _
      $region28: #{lstm_model_forward.6} parent=12 // pred_fallthru
        _
      %p54 = pneg %p34
      // Predicated region
      $region36: #{lstm_model_forward.6} parent=12 // pred_check
        _
      $region37: #{lstm_model_forward.6} parent=12 // pred_check_branch
        %56 = sbr.rel (%p34) target = $region39
      $region38: #{lstm_model_forward.6} parent=12 // pred_region
        %s57 = sand.u32 32, 7
      $region39: #{lstm_model_forward.6} parent=12 // pred_fallthru
        _
    $region13: #{lstm_model_forward.6} parent=8 // pred_fallthru
      _
    // Predicated region
    $region14: #{lstm_model_forward.6} parent=8 // pred_check
      %p18 = pneg %p14
    $region15: #{lstm_model_forward.6} parent=8 // pred_check_branch
      %20 = sbr.rel (%p18) target = $region17
    $region16: #{lstm_model_forward.6} parent=8 // pred_region
      %s21 = sshll.u32 1, 32
      %s22 = ssub.s32 %s21, 1
      loop: start=0, step=1, limit=1
      $region18: #{lstm_model_forward.6} parent=16 // loop_pre_header
        _
      $region19: #{lstm_model_forward.6} parent=16 // loop_header
        %s24 = sphi 0, %s28
        %p25 = scmp.ge.s32.totalorder %s24, 1
        %s29 = sphi %s1, %s1
        %s30 = sphi [#allocation4], [#allocation4]
      $region20: #{lstm_model_forward.6} parent=16 // loop_header_branch
        %27 = sbr.rel (%p25) target = $region24
      $region21: #{lstm_model_forward.6} parent=16 // loop_body
        %v31 = vld [vmem:[%s29] sm:%s22]
        %32 = vst [vmem:[%s30] sm:%s22] %v31
      $region22: #{lstm_model_forward.6} parent=16 // loop_footer
        %s28 = sadd.s32 1, %s24
      $region23: #{lstm_model_forward.6} parent=16 // loop_footer_branch
        %23 = sbr.rel target = $region19
      $region24: #{lstm_model_forward.6} parent=16 // loop_exit
        _
    $region17: #{lstm_model_forward.6} parent=8 // pred_fallthru
      _
    // Predicated region
    $region40: #{lstm_model_forward.6} parent=8 // pred_check
      _
    $region41: #{lstm_model_forward.6} parent=8 // pred_check_branch
      %60 = sbr.rel (0) target = $region43
    $region42: #{lstm_model_forward.6} parent=8 // pred_region
      %61 = vsyncadd [#allocation5], 512
    $region43: #{lstm_model_forward.6} parent=8 // pred_fallthru
      _
    %vm62 = vcmask 254976
    %63 = vst.msk [vmem:[#allocation2] sm:$0x3] %vm62, 0.0
    %64 = vst.msk [vmem:[#allocation3] sm:$0x3] %vm62, 0.0
    %s65 = smul.u32 32, 1
    %s66 = sshll.u32 %s65, 4
    %67 = dma.done [#allocation5], %s66
  $region9: #{lstm_model_forward.6} parent=0 // pred_fallthru
    _
  %v68 = vld [vmem:[#allocation4] sm:$0xff]
  %v69 = vld [vmem:[#allocation4 + $0x8] sm:$0xff]
  %v70 = vld [vmem:[#allocation4 + $0x10] sm:$0xff]
  %v71 = vld [vmem:[#allocation4 + $0x18] sm:$0xff]
  %v72 = vld [vmem:[#allocation2] sm:$0x3]
  %v73 = vld [vmem:[#allocation3] sm:$0x3]
  %v74 = vld [vmem:[%s0] sm:$0x3]
  %vm75 = vcmask 261120
  %v77 = vsel %vm75, %v72, 0
  %79 = vmatprep.subr.mxu0 0.0
  %80 = vmatpush1.msra.mxu0 0.0
  %81 = vmatprep.subr.mxu0 0.0
  %82 = vmatpush1.msra.mxu0 0.0
  %83 = vmatprep.subr.mxu0 0.0
  %84 = vmatpush1.msra.mxu0 0.0
  %85 = vmatprep.subr.mxu0 0.0
  %86 = vmatpush1.msra.mxu0 0.0
  %87 = vmatprep.subr.mxu0 0.0
  %88 = vmatpush1.msra.mxu0 0.0
  %89 = vmatprep.subr.mxu0 0.0
  %90 = vmatpush1.msra.mxu0 0.0
  %91 = vmatprep.subr.mxu0 0.0
  %92 = vmatpush1.msra.mxu0 0.0
  %93 = vmatprep.subr.mxu0 0.0
  %94 = vmatpush1.msra.mxu0 0.0
  %95 = vmatprep.subr.mxu0 0.0
  %96 = vmatpush1.msra.mxu0 0.0
  %97 = vmatprep.subr.mxu0 0.0
  %98 = vmatpush1.msra.mxu0 0.0
  %99 = vmatprep.subr.mxu0 0.0
  %100 = vmatpush1.msra.mxu0 0.0
  %101 = vmatprep.subr.mxu0 0.0
  %102 = vmatpush1.msra.mxu0 0.0
  %103 = vmatprep.subr.mxu0 0.0
  %104 = vmatpush1.msra.mxu0 %v71
  %105 = vmatprep.subr.mxu0 0.0
  %106 = vmatpush1.msra.mxu0 %v70
  %107 = vmatprep.subr.mxu0 0.0
  %108 = vmatpush1.msra.mxu0 %v69
  %109 = vmatprep.subr.mxu0 0.0
  %110 = vmatpush1.msra.mxu0 %v68
  %111 = vmatprep.subr.mxu0 0.0
  %112 = vmatpush2.msra.mxu0 0.0
  %113 = vmatprep.subr.mxu0 0.0
  %114 = vmatpush2.msra.mxu0 0.0
  %115 = vmatprep.subr.mxu0 0.0
  %116 = vmatpush2.msra.mxu0 0.0
  %117 = vmatprep.subr.mxu0 0.0
  %118 = vmatpush2.msra.mxu0 0.0
  %119 = vmatprep.subr.mxu0 0.0
  %120 = vmatpush2.msra.mxu0 0.0
  %121 = vmatprep.subr.mxu0 0.0
  %122 = vmatpush2.msra.mxu0 0.0
  %123 = vmatprep.subr.mxu0 0.0
  %124 = vmatpush2.msra.mxu0 0.0
  %125 = vmatprep.subr.mxu0 0.0
  %126 = vmatpush2.msra.mxu0 0.0
  %127 = vmatprep.subr.mxu0 0.0
  %128 = vmatpush2.msra.mxu0 0.0
  %129 = vmatprep.subr.mxu0 0.0
  %130 = vmatpush2.msra.mxu0 0.0
  %131 = vmatprep.subr.mxu0 0.0
  %132 = vmatpush2.msra.mxu0 0.0
  %133 = vmatprep.subr.mxu0 0.0
  %134 = vmatpush2.msra.mxu0 0.0
  %135 = vmatprep.subr.mxu0 0.0
  %136 = vmatpush2.msra.mxu0 0.0
  %137 = vmatprep.subr.mxu0 0.0
  %138 = vmatpush2.msra.mxu0 0.0
  %139 = vmatprep.subr.mxu0 0.0
  %140 = vmatpush2.msra.mxu0 0.0
  %141 = vmatprep.subr.mxu0 0.0
  %142 = vmatpush2.msra.mxu0 0.0
  %143 = vmatprep.mubr.f32.mxu0 0.0
  %144 = vmatmul.mubr.f32.gmra.mxu0 %v77
  %v145 = vpop.f32.mrf.mxu0
  %v146 = vadd.f32 0.0, %v145
  %v147 = vpop.f32.mrf.mxu0
  %148 = vdwg.mxu0
  %v149 = vadd.f32 %v74, %v146
  %v150 = vxor.u32 %v149, 2147483648
  %v151 = vmul.f32 %v150, 1.442695
  %v152 = vpow.pop %v151
  %v153 = vadd.f32 %v152, 1.0
  %v154 = vrcp.pop %v153
  %v155 = vmul.f32 1.0, %v154
  %v156 = vtanh.pop %v149
  %158 = vrot.lane.b32.xlu0 %v73, 32
  %v159 = vpop.permute.xlu0 %158
  %v161 = vmul.f32 %v155, %v159
  %163 = vrot.lane.b32.xlu0 %v156, 64
  %v164 = vpop.permute.xlu0 %163
  %v166 = vmul.f32 %v155, %v164
  %168 = vrot.lane.b32.xlu0 %v166, 32
  %v169 = vpop.permute.xlu0 %168
  %v171 = vadd.f32 %v161, %v169
  %v172 = vtanh.pop %v171
  %174 = vrot.lane.b32.xlu0 %v172, 64
  %v175 = vpop.permute.xlu0 %174
  %v177 = vmul.f32 %v155, %v175
  %179 = vrot.lane.b32.xlu0 %v177, 32
  %v180 = vpop.permute.xlu0 %179
  %vm182 = vcmask 254976
  %183 = vst.msk [vmem:[%s2] sm:$0x3] %vm182, %v180
  %s184 = scalar_lea.vmem %s0, 2
  %v185 = vld [vmem:[%s184] sm:$0x3]
  %v186 = vsel %vm75, %v180, 0
  %188 = vmatprep.subr.mxu0 0.0
  %189 = vmatpush1.msra.mxu0 0.0
  %190 = vmatprep.subr.mxu0 0.0
  %191 = vmatpush1.msra.mxu0 0.0
  %192 = vmatprep.subr.mxu0 0.0
  %193 = vmatpush1.msra.mxu0 0.0
  %194 = vmatprep.subr.mxu0 0.0
  %195 = vmatpush1.msra.mxu0 0.0
  %196 = vmatprep.subr.mxu0 0.0
  %197 = vmatpush1.msra.mxu0 0.0
  %198 = vmatprep.subr.mxu0 0.0
  %199 = vmatpush1.msra.mxu0 0.0
  %200 = vmatprep.subr.mxu0 0.0
  %201 = vmatpush1.msra.mxu0 0.0
  %202 = vmatprep.subr.mxu0 0.0
  %203 = vmatpush1.msra.mxu0 0.0
  %204 = vmatprep.subr.mxu0 0.0
  %205 = vmatpush1.msra.mxu0 0.0
  %206 = vmatprep.subr.mxu0 0.0
  %207 = vmatpush1.msra.mxu0 0.0
  %208 = vmatprep.subr.mxu0 0.0
  %209 = vmatpush1.msra.mxu0 0.0
  %210 = vmatprep.subr.mxu0 0.0
  %211 = vmatpush1.msra.mxu0 0.0
  %212 = vmatprep.subr.mxu0 0.0
  %213 = vmatpush1.msra.mxu0 %v71
  %214 = vmatprep.subr.mxu0 0.0
  %215 = vmatpush1.msra.mxu0 %v70
  %216 = vmatprep.subr.mxu0 0.0
  %217 = vmatpush1.msra.mxu0 %v69
  %218 = vmatprep.subr.mxu0 0.0
  %219 = vmatpush1.msra.mxu0 %v68
  %220 = vmatprep.subr.mxu0 0.0
  %221 = vmatpush2.msra.mxu0 0.0
  %222 = vmatprep.subr.mxu0 0.0
  %223 = vmatpush2.msra.mxu0 0.0
  %224 = vmatprep.subr.mxu0 0.0
  %225 = vmatpush2.msra.mxu0 0.0
  %226 = vmatprep.subr.mxu0 0.0
  %227 = vmatpush2.msra.mxu0 0.0
  %228 = vmatprep.subr.mxu0 0.0
  %229 = vmatpush2.msra.mxu0 0.0
  %230 = vmatprep.subr.mxu0 0.0
  %231 = vmatpush2.msra.mxu0 0.0
  %232 = vmatprep.subr.mxu0 0.0
  %233 = vmatpush2.msra.mxu0 0.0
  %234 = vmatprep.subr.mxu0 0.0
  %235 = vmatpush2.msra.mxu0 0.0
  %236 = vmatprep.subr.mxu0 0.0
  %237 = vmatpush2.msra.mxu0 0.0
  %238 = vmatprep.subr.mxu0 0.0
  %239 = vmatpush2.msra.mxu0 0.0
  %240 = vmatprep.subr.mxu0 0.0
  %241 = vmatpush2.msra.mxu0 0.0
  %242 = vmatprep.subr.mxu0 0.0
  %243 = vmatpush2.msra.mxu0 0.0
  %244 = vmatprep.subr.mxu0 0.0
  %245 = vmatpush2.msra.mxu0 0.0
  %246 = vmatprep.subr.mxu0 0.0
  %247 = vmatpush2.msra.mxu0 0.0
  %248 = vmatprep.subr.mxu0 0.0
  %249 = vmatpush2.msra.mxu0 0.0
  %250 = vmatprep.subr.mxu0 0.0
  %251 = vmatpush2.msra.mxu0 0.0
  %252 = vmatprep.mubr.f32.mxu0 0.0
  %253 = vmatmul.mubr.f32.gmra.mxu0 %v186
  %v254 = vpop.f32.mrf.mxu0
  %v255 = vadd.f32 0.0, %v254
  %v256 = vpop.f32.mrf.mxu0
  %257 = vdwg.mxu0
  %v258 = vadd.f32 %v185, %v255
  %v259 = vxor.u32 %v258, 2147483648
  %v260 = vmul.f32 %v259, 1.442695
  %v261 = vpow.pop %v260
  %v262 = vadd.f32 %v261, 1.0
  %v263 = vrcp.pop %v262
  %v264 = vmul.f32 1.0, %v263
  %v265 = vtanh.pop %v258
  %v266 = vmul.f32 %v264, %v171
  %268 = vrot.lane.b32.xlu0 %v265, 64
  %v269 = vpop.permute.xlu0 %268
  %v271 = vmul.f32 %v264, %v269
  %273 = vrot.lane.b32.xlu0 %v271, 32
  %v274 = vpop.permute.xlu0 %273
  %v276 = vadd.f32 %v266, %v274
  %v277 = vtanh.pop %v276
  %279 = vrot.lane.b32.xlu0 %v277, 64
  %v280 = vpop.permute.xlu0 %279
  %v282 = vmul.f32 %v264, %v280
  %284 = vrot.lane.b32.xlu0 %v282, 32
  %v285 = vpop.permute.xlu0 %284
  %s287 = scalar_lea.vmem %s2, 2
  %288 = vst.msk [vmem:[%s287] sm:$0x3] %vm182, %v285
  %s289 = scalar_lea.vmem %s0, 4
  %v290 = vld [vmem:[%s289] sm:$0x3]
  %v291 = vsel %vm75, %v285, 0
  %293 = vmatprep.subr.mxu0 0.0
  %294 = vmatpush1.msra.mxu0 0.0
  %295 = vmatprep.subr.mxu0 0.0
  %296 = vmatpush1.msra.mxu0 0.0
  %297 = vmatprep.subr.mxu0 0.0
  %298 = vmatpush1.msra.mxu0 0.0
  %299 = vmatprep.subr.mxu0 0.0
  %300 = vmatpush1.msra.mxu0 0.0
  %301 = vmatprep.subr.mxu0 0.0
  %302 = vmatpush1.msra.mxu0 0.0
  %303 = vmatprep.subr.mxu0 0.0
  %304 = vmatpush1.msra.mxu0 0.0
  %305 = vmatprep.subr.mxu0 0.0
  %306 = vmatpush1.msra.mxu0 0.0
  %307 = vmatprep.subr.mxu0 0.0
  %308 = vmatpush1.msra.mxu0 0.0
  %309 = vmatprep.subr.mxu0 0.0
  %310 = vmatpush1.msra.mxu0 0.0
  %311 = vmatprep.subr.mxu0 0.0
  %312 = vmatpush1.msra.mxu0 0.0
  %313 = vmatprep.subr.mxu0 0.0
  %314 = vmatpush1.msra.mxu0 0.0
  %315 = vmatprep.subr.mxu0 0.0
  %316 = vmatpush1.msra.mxu0 0.0
  %317 = vmatprep.subr.mxu0 0.0
  %318 = vmatpush1.msra.mxu0 %v71
  %319 = vmatprep.subr.mxu0 0.0
  %320 = vmatpush1.msra.mxu0 %v70
  %321 = vmatprep.subr.mxu0 0.0
  %322 = vmatpush1.msra.mxu0 %v69
  %323 = vmatprep.subr.mxu0 0.0
  %324 = vmatpush1.msra.mxu0 %v68
  %325 = vmatprep.subr.mxu0 0.0
  %326 = vmatpush2.msra.mxu0 0.0
  %327 = vmatprep.subr.mxu0 0.0
  %328 = vmatpush2.msra.mxu0 0.0
  %329 = vmatprep.subr.mxu0 0.0
  %330 = vmatpush2.msra.mxu0 0.0
  %331 = vmatprep.subr.mxu0 0.0
  %332 = vmatpush2.msra.mxu0 0.0
  %333 = vmatprep.subr.mxu0 0.0
  %334 = vmatpush2.msra.mxu0 0.0
  %335 = vmatprep.subr.mxu0 0.0
  %336 = vmatpush2.msra.mxu0 0.0
  %337 = vmatprep.subr.mxu0 0.0
  %338 = vmatpush2.msra.mxu0 0.0
  %339 = vmatprep.subr.mxu0 0.0
  %340 = vmatpush2.msra.mxu0 0.0
  %341 = vmatprep.subr.mxu0 0.0
  %342 = vmatpush2.msra.mxu0 0.0
  %343 = vmatprep.subr.mxu0 0.0
  %344 = vmatpush2.msra.mxu0 0.0
  %345 = vmatprep.subr.mxu0 0.0
  %346 = vmatpush2.msra.mxu0 0.0
  %347 = vmatprep.subr.mxu0 0.0
  %348 = vmatpush2.msra.mxu0 0.0
  %349 = vmatprep.subr.mxu0 0.0
  %350 = vmatpush2.msra.mxu0 0.0
  %351 = vmatprep.subr.mxu0 0.0
  %352 = vmatpush2.msra.mxu0 0.0
  %353 = vmatprep.subr.mxu0 0.0
  %354 = vmatpush2.msra.mxu0 0.0
  %355 = vmatprep.subr.mxu0 0.0
  %356 = vmatpush2.msra.mxu0 0.0
  %357 = vmatprep.mubr.f32.mxu0 0.0
  %358 = vmatmul.mubr.f32.gmra.mxu0 %v291
  %v359 = vpop.f32.mrf.mxu0
  %v360 = vadd.f32 0.0, %v359
  %v361 = vpop.f32.mrf.mxu0
  %362 = vdwg.mxu0
  %v363 = vadd.f32 %v290, %v360
  %v364 = vxor.u32 %v363, 2147483648
  %v365 = vmul.f32 %v364, 1.442695
  %v366 = vpow.pop %v365
  %v367 = vadd.f32 %v366, 1.0
  %v368 = vrcp.pop %v367
  %v369 = vmul.f32 1.0, %v368
  %v370 = vtanh.pop %v363
  %v371 = vmul.f32 %v369, %v276
  %373 = vrot.lane.b32.xlu0 %v370, 64
  %v374 = vpop.permute.xlu0 %373
  %v376 = vmul.f32 %v369, %v374
  %378 = vrot.lane.b32.xlu0 %v376, 32
  %v379 = vpop.permute.xlu0 %378
  %v381 = vadd.f32 %v371, %v379
  %v382 = vtanh.pop %v381
  %384 = vrot.lane.b32.xlu0 %v382, 64
  %v385 = vpop.permute.xlu0 %384
  %v387 = vmul.f32 %v369, %v385
  %389 = vrot.lane.b32.xlu0 %v387, 32
  %v390 = vpop.permute.xlu0 %389
  %s392 = scalar_lea.vmem %s2, 4
  %393 = vst.msk [vmem:[%s392] sm:$0x3] %vm182, %v390
  %s394 = scalar_lea.vmem %s0, 6
  %v395 = vld [vmem:[%s394] sm:$0x3]
  %v396 = vsel %vm75, %v390, 0
  %398 = vmatprep.subr.mxu0 0.0
  %399 = vmatpush1.msra.mxu0 0.0
  %400 = vmatprep.subr.mxu0 0.0
  %401 = vmatpush1.msra.mxu0 0.0
  %402 = vmatprep.subr.mxu0 0.0
  %403 = vmatpush1.msra.mxu0 0.0
  %404 = vmatprep.subr.mxu0 0.0
  %405 = vmatpush1.msra.mxu0 0.0
  %406 = vmatprep.subr.mxu0 0.0
  %407 = vmatpush1.msra.mxu0 0.0
  %408 = vmatprep.subr.mxu0 0.0
  %409 = vmatpush1.msra.mxu0 0.0
  %410 = vmatprep.subr.mxu0 0.0
  %411 = vmatpush1.msra.mxu0 0.0
  %412 = vmatprep.subr.mxu0 0.0
  %413 = vmatpush1.msra.mxu0 0.0
  %414 = vmatprep.subr.mxu0 0.0
  %415 = vmatpush1.msra.mxu0 0.0
  %416 = vmatprep.subr.mxu0 0.0
  %417 = vmatpush1.msra.mxu0 0.0
  %418 = vmatprep.subr.mxu0 0.0
  %419 = vmatpush1.msra.mxu0 0.0
  %420 = vmatprep.subr.mxu0 0.0
  %421 = vmatpush1.msra.mxu0 0.0
  %422 = vmatprep.subr.mxu0 0.0
  %423 = vmatpush1.msra.mxu0 %v71
  %424 = vmatprep.subr.mxu0 0.0
  %425 = vmatpush1.msra.mxu0 %v70
  %426 = vmatprep.subr.mxu0 0.0
  %427 = vmatpush1.msra.mxu0 %v69
  %428 = vmatprep.subr.mxu0 0.0
  %429 = vmatpush1.msra.mxu0 %v68
  %430 = vmatprep.subr.mxu0 0.0
  %431 = vmatpush2.msra.mxu0 0.0
  %432 = vmatprep.subr.mxu0 0.0
  %433 = vmatpush2.msra.mxu0 0.0
  %434 = vmatprep.subr.mxu0 0.0
  %435 = vmatpush2.msra.mxu0 0.0
  %436 = vmatprep.subr.mxu0 0.0
  %437 = vmatpush2.msra.mxu0 0.0
  %438 = vmatprep.subr.mxu0 0.0
  %439 = vmatpush2.msra.mxu0 0.0
  %440 = vmatprep.subr.mxu0 0.0
  %441 = vmatpush2.msra.mxu0 0.0
  %442 = vmatprep.subr.mxu0 0.0
  %443 = vmatpush2.msra.mxu0 0.0
  %444 = vmatprep.subr.mxu0 0.0
  %445 = vmatpush2.msra.mxu0 0.0
  %446 = vmatprep.subr.mxu0 0.0
  %447 = vmatpush2.msra.mxu0 0.0
  %448 = vmatprep.subr.mxu0 0.0
  %449 = vmatpush2.msra.mxu0 0.0
  %450 = vmatprep.subr.mxu0 0.0
  %451 = vmatpush2.msra.mxu0 0.0
  %452 = vmatprep.subr.mxu0 0.0
  %453 = vmatpush2.msra.mxu0 0.0
  %454 = vmatprep.subr.mxu0 0.0
  %455 = vmatpush2.msra.mxu0 0.0
  %456 = vmatprep.subr.mxu0 0.0
  %457 = vmatpush2.msra.mxu0 0.0
  %458 = vmatprep.subr.mxu0 0.0
  %459 = vmatpush2.msra.mxu0 0.0
  %460 = vmatprep.subr.mxu0 0.0
  %461 = vmatpush2.msra.mxu0 0.0
  %462 = vmatprep.mubr.f32.mxu0 0.0
  %463 = vmatmul.mubr.f32.gmra.mxu0 %v396
  %v464 = vpop.f32.mrf.mxu0
  %v465 = vadd.f32 0.0, %v464
  %v466 = vpop.f32.mrf.mxu0
  %467 = vdwg.mxu0
  %v468 = vadd.f32 %v395, %v465
  %v469 = vxor.u32 %v468, 2147483648
  %v470 = vmul.f32 %v469, 1.442695
  %v471 = vpow.pop %v470
  %v472 = vadd.f32 %v471, 1.0
  %v473 = vrcp.pop %v472
  %v474 = vmul.f32 1.0, %v473
  %v475 = vtanh.pop %v468
  %v476 = vmul.f32 %v474, %v381
  %478 = vrot.lane.b32.xlu0 %v475, 64
  %v479 = vpop.permute.xlu0 %478
  %v481 = vmul.f32 %v474, %v479
  %483 = vrot.lane.b32.xlu0 %v481, 32
  %v484 = vpop.permute.xlu0 %483
  %v486 = vadd.f32 %v476, %v484
  %v487 = vtanh.pop %v486
  %489 = vrot.lane.b32.xlu0 %v487, 64
  %v490 = vpop.permute.xlu0 %489
  %v492 = vmul.f32 %v474, %v490
  %494 = vrot.lane.b32.xlu0 %v492, 32
  %v495 = vpop.permute.xlu0 %494
  %s497 = scalar_lea.vmem %s2, 6
  %498 = vst.msk [vmem:[%s497] sm:$0x3] %vm182, %v495
  %s499 = scalar_lea.vmem %s0, 8
  %v500 = vld [vmem:[%s499] sm:$0x3]
  %v501 = vsel %vm75, %v495, 0
  %503 = vmatprep.subr.mxu0 0.0
  %504 = vmatpush1.msra.mxu0 0.0
  %505 = vmatprep.subr.mxu0 0.0
  %506 = vmatpush1.msra.mxu0 0.0
  %507 = vmatprep.subr.mxu0 0.0
  %508 = vmatpush1.msra.mxu0 0.0
  %509 = vmatprep.subr.mxu0 0.0
  %510 = vmatpush1.msra.mxu0 0.0
  %511 = vmatprep.subr.mxu0 0.0
  %512 = vmatpush1.msra.mxu0 0.0
  %513 = vmatprep.subr.mxu0 0.0
  %514 = vmatpush1.msra.mxu0 0.0
  %515 = vmatprep.subr.mxu0 0.0
  %516 = vmatpush1.msra.mxu0 0.0
  %517 = vmatprep.subr.mxu0 0.0
  %518 = vmatpush1.msra.mxu0 0.0
  %519 = vmatprep.subr.mxu0 0.0
  %520 = vmatpush1.msra.mxu0 0.0
  %521 = vmatprep.subr.mxu0 0.0
  %522 = vmatpush1.msra.mxu0 0.0
  %523 = vmatprep.subr.mxu0 0.0
  %524 = vmatpush1.msra.mxu0 0.0
  %525 = vmatprep.subr.mxu0 0.0
  %526 = vmatpush1.msra.mxu0 0.0
  %527 = vmatprep.subr.mxu0 0.0
  %528 = vmatpush1.msra.mxu0 %v71
  %529 = vmatprep.subr.mxu0 0.0
  %530 = vmatpush1.msra.mxu0 %v70
  %531 = vmatprep.subr.mxu0 0.0
  %532 = vmatpush1.msra.mxu0 %v69
  %533 = vmatprep.subr.mxu0 0.0
  %534 = vmatpush1.msra.mxu0 %v68
  %535 = vmatprep.subr.mxu0 0.0
  %536 = vmatpush2.msra.mxu0 0.0
  %537 = vmatprep.subr.mxu0 0.0
  %538 = vmatpush2.msra.mxu0 0.0
  %539 = vmatprep.subr.mxu0 0.0
  %540 = vmatpush2.msra.mxu0 0.0
  %541 = vmatprep.subr.mxu0 0.0
  %542 = vmatpush2.msra.mxu0 0.0
  %543 = vmatprep.subr.mxu0 0.0
  %544 = vmatpush2.msra.mxu0 0.0
  %545 = vmatprep.subr.mxu0 0.0
  %546 = vmatpush2.msra.mxu0 0.0
  %547 = vmatprep.subr.mxu0 0.0
  %548 = vmatpush2.msra.mxu0 0.0
  %549 = vmatprep.subr.mxu0 0.0
  %550 = vmatpush2.msra.mxu0 0.0
  %551 = vmatprep.subr.mxu0 0.0
  %552 = vmatpush2.msra.mxu0 0.0
  %553 = vmatprep.subr.mxu0 0.0
  %554 = vmatpush2.msra.mxu0 0.0
  %555 = vmatprep.subr.mxu0 0.0
  %556 = vmatpush2.msra.mxu0 0.0
  %557 = vmatprep.subr.mxu0 0.0
  %558 = vmatpush2.msra.mxu0 0.0
  %559 = vmatprep.subr.mxu0 0.0
  %560 = vmatpush2.msra.mxu0 0.0
  %561 = vmatprep.subr.mxu0 0.0
  %562 = vmatpush2.msra.mxu0 0.0
  %563 = vmatprep.subr.mxu0 0.0
  %564 = vmatpush2.msra.mxu0 0.0
  %565 = vmatprep.subr.mxu0 0.0
  %566 = vmatpush2.msra.mxu0 0.0
  %567 = vmatprep.mubr.f32.mxu0 0.0
  %568 = vmatmul.mubr.f32.gmra.mxu0 %v501
  %v569 = vpop.f32.mrf.mxu0
  %v570 = vadd.f32 0.0, %v569
  %v571 = vpop.f32.mrf.mxu0
  %572 = vdwg.mxu0
  %v573 = vadd.f32 %v500, %v570
  %v574 = vxor.u32 %v573, 2147483648
  %v575 = vmul.f32 %v574, 1.442695
  %v576 = vpow.pop %v575
  %v577 = vadd.f32 %v576, 1.0
  %v578 = vrcp.pop %v577
  %v579 = vmul.f32 1.0, %v578
  %v580 = vtanh.pop %v573
  %v581 = vmul.f32 %v579, %v486
  %583 = vrot.lane.b32.xlu0 %v580, 64
  %v584 = vpop.permute.xlu0 %583
  %v586 = vmul.f32 %v579, %v584
  %588 = vrot.lane.b32.xlu0 %v586, 32
  %v589 = vpop.permute.xlu0 %588
  %v591 = vadd.f32 %v581, %v589
  %v592 = vtanh.pop %v591
  %594 = vrot.lane.b32.xlu0 %v592, 64
  %v595 = vpop.permute.xlu0 %594
  %v597 = vmul.f32 %v579, %v595
  %599 = vrot.lane.b32.xlu0 %v597, 32
  %v600 = vpop.permute.xlu0 %599
  %s602 = scalar_lea.vmem %s2, 8
  %603 = vst.msk [vmem:[%s602] sm:$0x3] %vm182, %v600
  %s604 = scalar_lea.vmem %s0, 10
  %v605 = vld [vmem:[%s604] sm:$0x3]
  %v606 = vsel %vm75, %v600, 0
  %608 = vmatprep.subr.mxu0 0.0
  %609 = vmatpush1.msra.mxu0 0.0
  %610 = vmatprep.subr.mxu0 0.0
  %611 = vmatpush1.msra.mxu0 0.0
  %612 = vmatprep.subr.mxu0 0.0
  %613 = vmatpush1.msra.mxu0 0.0
  %614 = vmatprep.subr.mxu0 0.0
  %615 = vmatpush1.msra.mxu0 0.0
  %616 = vmatprep.subr.mxu0 0.0
  %617 = vmatpush1.msra.mxu0 0.0
  %618 = vmatprep.subr.mxu0 0.0
  %619 = vmatpush1.msra.mxu0 0.0
  %620 = vmatprep.subr.mxu0 0.0
  %621 = vmatpush1.msra.mxu0 0.0
  %622 = vmatprep.subr.mxu0 0.0
  %623 = vmatpush1.msra.mxu0 0.0
  %624 = vmatprep.subr.mxu0 0.0
  %625 = vmatpush1.msra.mxu0 0.0
  %626 = vmatprep.subr.mxu0 0.0
  %627 = vmatpush1.msra.mxu0 0.0
  %628 = vmatprep.subr.mxu0 0.0
  %629 = vmatpush1.msra.mxu0 0.0
  %630 = vmatprep.subr.mxu0 0.0
  %631 = vmatpush1.msra.mxu0 0.0
  %632 = vmatprep.subr.mxu0 0.0
  %633 = vmatpush1.msra.mxu0 %v71
  %634 = vmatprep.subr.mxu0 0.0
  %635 = vmatpush1.msra.mxu0 %v70
  %636 = vmatprep.subr.mxu0 0.0
  %637 = vmatpush1.msra.mxu0 %v69
  %638 = vmatprep.subr.mxu0 0.0
  %639 = vmatpush1.msra.mxu0 %v68
  %640 = vmatprep.subr.mxu0 0.0
  %641 = vmatpush2.msra.mxu0 0.0
  %642 = vmatprep.subr.mxu0 0.0
  %643 = vmatpush2.msra.mxu0 0.0
  %644 = vmatprep.subr.mxu0 0.0
  %645 = vmatpush2.msra.mxu0 0.0
  %646 = vmatprep.subr.mxu0 0.0
  %647 = vmatpush2.msra.mxu0 0.0
  %648 = vmatprep.subr.mxu0 0.0
  %649 = vmatpush2.msra.mxu0 0.0
  %650 = vmatprep.subr.mxu0 0.0
  %651 = vmatpush2.msra.mxu0 0.0
  %652 = vmatprep.subr.mxu0 0.0
  %653 = vmatpush2.msra.mxu0 0.0
  %654 = vmatprep.subr.mxu0 0.0
  %655 = vmatpush2.msra.mxu0 0.0
  %656 = vmatprep.subr.mxu0 0.0
  %657 = vmatpush2.msra.mxu0 0.0
  %658 = vmatprep.subr.mxu0 0.0
  %659 = vmatpush2.msra.mxu0 0.0
  %660 = vmatprep.subr.mxu0 0.0
  %661 = vmatpush2.msra.mxu0 0.0
  %662 = vmatprep.subr.mxu0 0.0
  %663 = vmatpush2.msra.mxu0 0.0
  %664 = vmatprep.subr.mxu0 0.0
  %665 = vmatpush2.msra.mxu0 0.0
  %666 = vmatprep.subr.mxu0 0.0
  %667 = vmatpush2.msra.mxu0 0.0
  %668 = vmatprep.subr.mxu0 0.0
  %669 = vmatpush2.msra.mxu0 0.0
  %670 = vmatprep.subr.mxu0 0.0
  %671 = vmatpush2.msra.mxu0 0.0
  %672 = vmatprep.mubr.f32.mxu0 0.0
  %673 = vmatmul.mubr.f32.gmra.mxu0 %v606
  %v674 = vpop.f32.mrf.mxu0
  %v675 = vadd.f32 0.0, %v674
  %v676 = vpop.f32.mrf.mxu0
  %677 = vdwg.mxu0
  %v678 = vadd.f32 %v605, %v675
  %v679 = vxor.u32 %v678, 2147483648
  %v680 = vmul.f32 %v679, 1.442695
  %v681 = vpow.pop %v680
  %v682 = vadd.f32 %v681, 1.0
  %v683 = vrcp.pop %v682
  %v684 = vmul.f32 1.0, %v683
  %v685 = vtanh.pop %v678
  %v686 = vmul.f32 %v684, %v591
  %688 = vrot.lane.b32.xlu0 %v685, 64
  %v689 = vpop.permute.xlu0 %688
  %v691 = vmul.f32 %v684, %v689
  %693 = vrot.lane.b32.xlu0 %v691, 32
  %v694 = vpop.permute.xlu0 %693
  %v696 = vadd.f32 %v686, %v694
  %v697 = vtanh.pop %v696
  %699 = vrot.lane.b32.xlu0 %v697, 64
  %v700 = vpop.permute.xlu0 %699
  %v702 = vmul.f32 %v684, %v700
  %704 = vrot.lane.b32.xlu0 %v702, 32
  %v705 = vpop.permute.xlu0 %704
  %s707 = scalar_lea.vmem %s2, 10
  %708 = vst.msk [vmem:[%s707] sm:$0x3] %vm182, %v705
  %s709 = scalar_lea.vmem %s0, 12
  %v710 = vld [vmem:[%s709] sm:$0x3]
  %v711 = vsel %vm75, %v705, 0
  %713 = vmatprep.subr.mxu0 0.0
  %714 = vmatpush1.msra.mxu0 0.0
  %715 = vmatprep.subr.mxu0 0.0
  %716 = vmatpush1.msra.mxu0 0.0
  %717 = vmatprep.subr.mxu0 0.0
  %718 = vmatpush1.msra.mxu0 0.0
  %719 = vmatprep.subr.mxu0 0.0
  %720 = vmatpush1.msra.mxu0 0.0
  %721 = vmatprep.subr.mxu0 0.0
  %722 = vmatpush1.msra.mxu0 0.0
  %723 = vmatprep.subr.mxu0 0.0
  %724 = vmatpush1.msra.mxu0 0.0
  %725 = vmatprep.subr.mxu0 0.0
  %726 = vmatpush1.msra.mxu0 0.0
  %727 = vmatprep.subr.mxu0 0.0
  %728 = vmatpush1.msra.mxu0 0.0
  %729 = vmatprep.subr.mxu0 0.0
  %730 = vmatpush1.msra.mxu0 0.0
  %731 = vmatprep.subr.mxu0 0.0
  %732 = vmatpush1.msra.mxu0 0.0
  %733 = vmatprep.subr.mxu0 0.0
  %734 = vmatpush1.msra.mxu0 0.0
  %735 = vmatprep.subr.mxu0 0.0
  %736 = vmatpush1.msra.mxu0 0.0
  %737 = vmatprep.subr.mxu0 0.0
  %738 = vmatpush1.msra.mxu0 %v71
  %739 = vmatprep.subr.mxu0 0.0
  %740 = vmatpush1.msra.mxu0 %v70
  %741 = vmatprep.subr.mxu0 0.0
  %742 = vmatpush1.msra.mxu0 %v69
  %743 = vmatprep.subr.mxu0 0.0
  %744 = vmatpush1.msra.mxu0 %v68
  %745 = vmatprep.subr.mxu0 0.0
  %746 = vmatpush2.msra.mxu0 0.0
  %747 = vmatprep.subr.mxu0 0.0
  %748 = vmatpush2.msra.mxu0 0.0
  %749 = vmatprep.subr.mxu0 0.0
  %750 = vmatpush2.msra.mxu0 0.0
  %751 = vmatprep.subr.mxu0 0.0
  %752 = vmatpush2.msra.mxu0 0.0
  %753 = vmatprep.subr.mxu0 0.0
  %754 = vmatpush2.msra.mxu0 0.0
  %755 = vmatprep.subr.mxu0 0.0
  %756 = vmatpush2.msra.mxu0 0.0
  %757 = vmatprep.subr.mxu0 0.0
  %758 = vmatpush2.msra.mxu0 0.0
  %759 = vmatprep.subr.mxu0 0.0
  %760 = vmatpush2.msra.mxu0 0.0
  %761 = vmatprep.subr.mxu0 0.0
  %762 = vmatpush2.msra.mxu0 0.0
  %763 = vmatprep.subr.mxu0 0.0
  %764 = vmatpush2.msra.mxu0 0.0
  %765 = vmatprep.subr.mxu0 0.0
  %766 = vmatpush2.msra.mxu0 0.0
  %767 = vmatprep.subr.mxu0 0.0
  %768 = vmatpush2.msra.mxu0 0.0
  %769 = vmatprep.subr.mxu0 0.0
  %770 = vmatpush2.msra.mxu0 0.0
  %771 = vmatprep.subr.mxu0 0.0
  %772 = vmatpush2.msra.mxu0 0.0
  %773 = vmatprep.subr.mxu0 0.0
  %774 = vmatpush2.msra.mxu0 0.0
  %775 = vmatprep.subr.mxu0 0.0
  %776 = vmatpush2.msra.mxu0 0.0
  %777 = vmatprep.mubr.f32.mxu0 0.0
  %778 = vmatmul.mubr.f32.gmra.mxu0 %v711
  %v779 = vpop.f32.mrf.mxu0
  %v780 = vadd.f32 0.0, %v779
  %v781 = vpop.f32.mrf.mxu0
  %782 = vdwg.mxu0
  %v783 = vadd.f32 %v710, %v780
  %v784 = vxor.u32 %v783, 2147483648
  %v785 = vmul.f32 %v784, 1.442695
  %v786 = vpow.pop %v785
  %v787 = vadd.f32 %v786, 1.0
  %v788 = vrcp.pop %v787
  %v789 = vmul.f32 1.0, %v788
  %v790 = vtanh.pop %v783
  %v791 = vmul.f32 %v789, %v696
  %793 = vrot.lane.b32.xlu0 %v790, 64
  %v794 = vpop.permute.xlu0 %793
  %v796 = vmul.f32 %v789, %v794
  %798 = vrot.lane.b32.xlu0 %v796, 32
  %v799 = vpop.permute.xlu0 %798
  %v801 = vadd.f32 %v791, %v799
  %v802 = vtanh.pop %v801
  %804 = vrot.lane.b32.xlu0 %v802, 64
  %v805 = vpop.permute.xlu0 %804
  %v807 = vmul.f32 %v789, %v805
  %809 = vrot.lane.b32.xlu0 %v807, 32
  %v810 = vpop.permute.xlu0 %809
  %s812 = scalar_lea.vmem %s2, 12
  %813 = vst.msk [vmem:[%s812] sm:$0x3] %vm182, %v810
  %s814 = scalar_lea.vmem %s0, 14
  %v815 = vld [vmem:[%s814] sm:$0x3]
  %v816 = vsel %vm75, %v810, 0
  %818 = vmatprep.subr.mxu0 0.0
  %819 = vmatpush1.msra.mxu0 0.0
  %820 = vmatprep.subr.mxu0 0.0
  %821 = vmatpush1.msra.mxu0 0.0
  %822 = vmatprep.subr.mxu0 0.0
  %823 = vmatpush1.msra.mxu0 0.0
  %824 = vmatprep.subr.mxu0 0.0
  %825 = vmatpush1.msra.mxu0 0.0
  %826 = vmatprep.subr.mxu0 0.0
  %827 = vmatpush1.msra.mxu0 0.0
  %828 = vmatprep.subr.mxu0 0.0
  %829 = vmatpush1.msra.mxu0 0.0
  %830 = vmatprep.subr.mxu0 0.0
  %831 = vmatpush1.msra.mxu0 0.0
  %832 = vmatprep.subr.mxu0 0.0
  %833 = vmatpush1.msra.mxu0 0.0
  %834 = vmatprep.subr.mxu0 0.0
  %835 = vmatpush1.msra.mxu0 0.0
  %836 = vmatprep.subr.mxu0 0.0
  %837 = vmatpush1.msra.mxu0 0.0
  %838 = vmatprep.subr.mxu0 0.0
  %839 = vmatpush1.msra.mxu0 0.0
  %840 = vmatprep.subr.mxu0 0.0
  %841 = vmatpush1.msra.mxu0 0.0
  %842 = vmatprep.subr.mxu0 0.0
  %843 = vmatpush1.msra.mxu0 %v71
  %844 = vmatprep.subr.mxu0 0.0
  %845 = vmatpush1.msra.mxu0 %v70
  %846 = vmatprep.subr.mxu0 0.0
  %847 = vmatpush1.msra.mxu0 %v69
  %848 = vmatprep.subr.mxu0 0.0
  %849 = vmatpush1.msra.mxu0 %v68
  %850 = vmatprep.subr.mxu0 0.0
  %851 = vmatpush2.msra.mxu0 0.0
  %852 = vmatprep.subr.mxu0 0.0
  %853 = vmatpush2.msra.mxu0 0.0
  %854 = vmatprep.subr.mxu0 0.0
  %855 = vmatpush2.msra.mxu0 0.0
  %856 = vmatprep.subr.mxu0 0.0
  %857 = vmatpush2.msra.mxu0 0.0
  %858 = vmatprep.subr.mxu0 0.0
  %859 = vmatpush2.msra.mxu0 0.0
  %860 = vmatprep.subr.mxu0 0.0
  %861 = vmatpush2.msra.mxu0 0.0
  %862 = vmatprep.subr.mxu0 0.0
  %863 = vmatpush2.msra.mxu0 0.0
  %864 = vmatprep.subr.mxu0 0.0
  %865 = vmatpush2.msra.mxu0 0.0
  %866 = vmatprep.subr.mxu0 0.0
  %867 = vmatpush2.msra.mxu0 0.0
  %868 = vmatprep.subr.mxu0 0.0
  %869 = vmatpush2.msra.mxu0 0.0
  %870 = vmatprep.subr.mxu0 0.0
  %871 = vmatpush2.msra.mxu0 0.0
  %872 = vmatprep.subr.mxu0 0.0
  %873 = vmatpush2.msra.mxu0 0.0
  %874 = vmatprep.subr.mxu0 0.0
  %875 = vmatpush2.msra.mxu0 0.0
  %876 = vmatprep.subr.mxu0 0.0
  %877 = vmatpush2.msra.mxu0 0.0
  %878 = vmatprep.subr.mxu0 0.0
  %879 = vmatpush2.msra.mxu0 0.0
  %880 = vmatprep.subr.mxu0 0.0
  %881 = vmatpush2.msra.mxu0 0.0
  %882 = vmatprep.mubr.f32.mxu0 0.0
  %883 = vmatmul.mubr.f32.gmra.mxu0 %v816
  %v884 = vpop.f32.mrf.mxu0
  %v885 = vadd.f32 0.0, %v884
  %v886 = vpop.f32.mrf.mxu0
  %887 = vdwg.mxu0
  %v888 = vadd.f32 %v815, %v885
  %v889 = vxor.u32 %v888, 2147483648
  %v890 = vmul.f32 %v889, 1.442695
  %v891 = vpow.pop %v890
  %v892 = vadd.f32 %v891, 1.0
  %v893 = vrcp.pop %v892
  %v894 = vmul.f32 1.0, %v893
  %v895 = vtanh.pop %v888
  %v896 = vmul.f32 %v894, %v801
  %898 = vrot.lane.b32.xlu0 %v895, 64
  %v899 = vpop.permute.xlu0 %898
  %v901 = vmul.f32 %v894, %v899
  %903 = vrot.lane.b32.xlu0 %v901, 32
  %v904 = vpop.permute.xlu0 %903
  %v906 = vadd.f32 %v896, %v904
  %v907 = vtanh.pop %v906
  %909 = vrot.lane.b32.xlu0 %v907, 64
  %v910 = vpop.permute.xlu0 %909
  %v912 = vmul.f32 %v894, %v910
  %914 = vrot.lane.b32.xlu0 %v912, 32
  %v915 = vpop.permute.xlu0 %914
  %s917 = scalar_lea.vmem %s2, 14
  %918 = vst.msk [vmem:[%s917] sm:$0x3] %vm182, %v915
  %919 = vst.msk [vmem:[#allocation2] sm:$0x3] %vm182, %v915
  %921 = vrot.lane.b32.xlu0 %v906, 96
  %v922 = vpop.permute.xlu0 %921
  %924 = vst.msk [vmem:[#allocation3] sm:$0x3] %vm182, %v922
  // Predicated region
  $region44: #{lstm_model_forward.6} parent=0 // pred_check
    _
  $region45: #{lstm_model_forward.6} parent=0 // pred_check_branch
    %926 = sbr.rel (0) target = $region47
  $region46: #{lstm_model_forward.6} parent=0 // pred_region
    _
  $region47: #{lstm_model_forward.6} parent=0 // pred_fallthru
    _
  // Predicated region
  $region48: #{lstm_model_forward.6} parent=0 // pred_check
    _
  $region49: #{lstm_model_forward.6} parent=0 // pred_check_branch
    %928 = sbr.rel (0) target = $region51
  $region50: #{lstm_model_forward.6} parent=0 // pred_region
    _
  $region51: #{lstm_model_forward.6} parent=0 // pred_fallthru
    _
  %929 = vsyncmov [#allocation5]
  %s930 = vpop.sfrf %929
  %p931 = scmp.eq.s32.totalorder %s930, 0
  %p932 = pneg %p931
  %934 = shalt.err (%p932)

</llo_original>
